<compile_context>
chip_gen: v6e
topology: v6e:2x2x1
jax: 0.10.0
libtpu: 0.0.40
codegen_flags: <defaults>
</compile_context>

<pallas_src>
import functools

import jax
import jax.numpy as jnp
from jax.experimental import pallas as pl
from jax.experimental.pallas import tpu as pltpu


# ----------------------------- Pallas kernel --------------------------------
def valuenet_kernel(emb_ref,                       # (T, B, E)   bf16
                    w0_ref, b0_ref,                # (E+H, 4H) bf16 / (1, 4H) f32
                    w1_ref, b1_ref,                # (2H, 4H)  bf16 / (1, 4H) f32
                    w2_ref, b2_ref,                # (2H, 4H)  bf16 / (1, 4H) f32
                    h0_ref, c0_ref,                # (3, B, H) f32
                    wlin_ref, blin_ref,            # (H, Opad) bf16 / (1, Opad) f32
                    logits_ref,                    # (T, B, Opad) f32   out
                    h_out_ref, c_out_ref,          # (3, B, H) f32      out
                    h_st, c_st,                    # (3, B, H) f32      scratch
                    xh0, xh12):                    # (B, E+H)/(B, 2H) bf16 scratch
    T = emb_ref.shape[0]
    E = emb_ref.shape[-1]
    H = h0_ref.shape[-1]

    # Recurrent state lives in VMEM scratch for the whole sequence.
    h_st[...] = h0_ref[...]
    c_st[...] = c0_ref[...]

    def sigmoid(x):
        # Single EUP tanh per gate (avoid a possible exp + divide expansion).
        return 0.5 * (jnp.tanh(0.5 * x) + 1.0)

    def cell(layer, xh_ref, w_ref, b_ref):
        # Fused [x | h] @ W, f32 accumulate; PyTorch gate order (i, f, g, o).
        gates = (jnp.dot(xh_ref[...], w_ref[...],
                         preferred_element_type=jnp.float32)
                 + b_ref[...])                                 # (B, 4H) f32
        i = sigmoid(gates[:, 0 * H:1 * H])
        f = sigmoid(gates[:, 1 * H:2 * H])
        g = jnp.tanh(gates[:, 2 * H:3 * H])
        o = sigmoid(gates[:, 3 * H:4 * H])
        c_new = f * c_st[layer] + i * g
        h_new = o * jnp.tanh(c_new)
        h_st[layer] = h_new
        c_st[layer] = c_new
        return h_new

    def step(t, carry):
        # ---- layer 0: xh0 = [emb_t | h0] via two lane-aligned stores ----
        xh0[:, :E] = emb_ref[t]                                # bf16 already
        xh0[:, E:] = h_st[0].astype(xh0.dtype)
        h1 = cell(0, xh0, w0_ref, b0_ref)
        # ---- layer 1 ----
        xh12[:, :H] = h1.astype(xh12.dtype)
        xh12[:, H:] = h_st[1].astype(xh12.dtype)
        h2 = cell(1, xh12, w1_ref, b1_ref)
        # ---- layer 2 ----
        xh12[:, :H] = h2.astype(xh12.dtype)
        xh12[:, H:] = h_st[2].astype(xh12.dtype)
        h3 = cell(2, xh12, w2_ref, b2_ref)
        # ---- output projection (lane-dense padded width) ----
        logits_ref[t] = (jnp.dot(h3.astype(wlin_ref.dtype), wlin_ref[...],
                                 preferred_element_type=jnp.float32)
                         + blin_ref[...])
        return carry

    # T is small & static: unroll so the LLO scheduler can overlap step
    # boundaries (projection of step t with layer-0 matmul of step t+1).
    jax.lax.fori_loop(0, T, step, 0, unroll=True)

    # One explicit final store of the recurrent state.
    h_out_ref[...] = h_st[...]
    c_out_ref[...] = c_st[...]


# ------------------------------ JAX wrapper ----------------------------------
def make_params(key, voc_size, embed_size, hidden_size, n_objs,
                weight_dtype=jnp.bfloat16):
    """Parameter init mirroring the nn.Module shapes, pre-fused / pre-transposed
    for the kernel.  Big matmul weights stored in `weight_dtype` (bf16)."""
    E, H, V = embed_size, hidden_size, voc_size
    out_dim = V * n_objs
    out_pad = ((out_dim + 127) // 128) * 128
    ks = jax.random.split(key, 16)
    bound = 1.0 / jnp.sqrt(jnp.float32(H))

    def u(k, shape):
        return jax.random.uniform(k, shape, jnp.float32, -bound, bound)

    params = {"embed": jax.random.normal(ks[0], (V, E), jnp.float32)}
    in_sizes = [E, H, H]
    ki = 1
    for l in range(3):
        wih = u(ks[ki], (4 * H, in_sizes[l])); ki += 1    # torch layout (4H, in)
        whh = u(ks[ki], (4 * H, H)); ki += 1              # torch layout (4H, H)
        bih = u(ks[ki], (4 * H,)); ki += 1
        bhh = u(ks[ki], (4 * H,)); ki += 1
        # Fused, pre-transposed weight: [x | h] @ W == x @ wih.T + h @ whh.T
        params[f"w{l}"] = jnp.concatenate([wih.T, whh.T],
                                          axis=0).astype(weight_dtype)
        params[f"b{l}"] = (bih + bhh).reshape(1, 4 * H)   # fused bias, f32
    wlin = u(ks[ki], (out_dim, H)); ki += 1               # torch layout (out, H)
    blin = u(ks[ki], (out_dim,)); ki += 1
    # Pad the projection to a lane-dense multiple of 128.
    wlin_t = jnp.zeros((H, out_pad), jnp.float32).at[:, :out_dim].set(wlin.T)
    blin_p = jnp.zeros((1, out_pad), jnp.float32).at[:, :out_dim].set(blin)
    params["wlin"] = wlin_t.astype(weight_dtype)
    params["blin"] = blin_p
    return params


@functools.partial(jax.jit, static_argnames=("n_objs",))
def value_net_forward_seq(tokens, h, c, params, *, n_objs=1):
    """tokens: (T, B) int32; h/c: (3, B, H) f32.
    Returns logits (T, B, n_objs, V) and the final (h, c).  Mathematically
    identical to calling ValueNet.forward once per timestep with these tokens,
    but the whole sequence runs inside one pallas_call with weights and state
    resident in VMEM."""
    T, B = tokens.shape
    V, E = params["embed"].shape
    H = h.shape[-1]
    wdt = params["w0"].dtype
    out_pad = params["wlin"].shape[-1]

    # Embedding gather hoisted to XLA; bf16 MXU operand for the fused matmul.
    emb = params["embed"][tokens].astype(wdt)                 # (T, B, E)

    vmem = pl.BlockSpec(memory_space=pltpu.MemorySpace.VMEM)  # whole array, VMEM

    logits_pad, h_out, c_out = pl.pallas_call(
        valuenet_kernel,
        out_shape=(jax.ShapeDtypeStruct((T, B, out_pad), jnp.float32),
                   jax.ShapeDtypeStruct((3, B, H), jnp.float32),
                   jax.ShapeDtypeStruct((3, B, H), jnp.float32)),
        in_specs=[vmem] * 11,
        out_specs=(vmem, vmem, vmem),
        scratch_shapes=[
            pltpu.VMEM((3, B, H), jnp.float32),   # h state
            pltpu.VMEM((3, B, H), jnp.float32),   # c state
            pltpu.VMEM((B, E + H), wdt),          # [x | h] layer 0
            pltpu.VMEM((B, 2 * H), wdt),          # [x | h] layers 1, 2
        ],
    )(emb,
      params["w0"], params["b0"],
      params["w1"], params["b1"],
      params["w2"], params["b2"],
      h, c,
      params["wlin"], params["blin"])

    logits = logits_pad[..., :V * n_objs].reshape(T, B, n_objs, V)
    return logits, (h_out, c_out)


def value_net_forward(tokens, h, c, params, *, n_objs=1):
    """Exactly ValueNet.forward: tokens (B,) -> (B, n_objs, V), (h', c')."""
    logits, (h_out, c_out) = value_net_forward_seq(tokens[None, :], h, c,
                                                   params, n_objs=n_objs)
    return logits[0], (h_out, c_out)


# --------------------------- pure-JAX reference ------------------------------
def value_net_step_ref(tokens, h, c, params, n_objs=1):
    V, E = params["embed"].shape
    H = h.shape[-1]
    out_dim = V * n_objs
    x = params["embed"][tokens].astype(jnp.float32)       # (B, E)
    hs, cs = [], []
    for l in range(3):
        W = params[f"w{l}"].astype(jnp.float32)
        gates = jnp.concatenate([x, h[l]], axis=-1) @ W + params[f"b{l}"]
        i = jax.nn.sigmoid(gates[:, 0 * H:1 * H])
        f = jax.nn.sigmoid(gates[:, 1 * H:2 * H])
        g = jnp.tanh(gates[:, 2 * H:3 * H])
        o = jax.nn.sigmoid(gates[:, 3 * H:4 * H])
        c_new = f * c[l] + i * g
        h_new = o * jnp.tanh(c_new)
        hs.append(h_new)
        cs.append(c_new)
        x = h_new
    wlin = params["wlin"].astype(jnp.float32)[:, :out_dim]
    logits = x @ wlin + params["blin"][:, :out_dim]
    return (logits.reshape(tokens.shape[0], n_objs, V),
            (jnp.stack(hs), jnp.stack(cs)))


def value_net_seq_ref(tokens_TB, h, c, params, n_objs=1):
    outs = []
    for t in range(tokens_TB.shape[0]):
        o, (h, c) = value_net_step_ref(tokens_TB[t], h, c, params, n_objs)
        outs.append(o)
    return jnp.stack(outs), (h, c)


# --------------------------------- main ---------------------------------------
if __name__ == "__main__":
    # Small, LSTM-friendly shapes implied by the module.
    # (For real throughput raise B toward 64-256 — MXU M-utilization is ~3%
    #  at B=8; matmul latency is flat until M fills the array height.)
    B, V, E, H, N_OBJS, T = 8, 32, 128, 128, 1, 6

    key = jax.random.PRNGKey(0)
    kp, kt = jax.random.split(key)
    params = make_params(kp, V, E, H, N_OBJS)

    tokens_seq = jax.random.randint(kt, (T, B), 0, V, dtype=jnp.int32)
    h0 = jnp.zeros((3, B, H), jnp.float32)   # init_h()
    c0 = jnp.zeros((3, B, H), jnp.float32)

    # --- single-step forward (== ValueNet.forward) ---
    out1, (h1, c1) = value_net_forward(tokens_seq[0], h0, c0, params,
                                       n_objs=N_OBJS)
    jax.block_until_ready((out1, h1, c1))
    out1_ref, (h1_ref, c1_ref) = value_net_step_ref(tokens_seq[0], h0, c0,
                                                    params, N_OBJS)
    assert out1.shape == (B, N_OBJS, V)
    assert h1.shape == (3, B, H) and c1.shape == (3, B, H)
    assert jnp.allclose(out1, out1_ref, atol=3e-2, rtol=1e-2)
    assert jnp.allclose(h1, h1_ref, atol=3e-2, rtol=1e-2)
    assert jnp.allclose(c1, c1_ref, atol=3e-2, rtol=1e-2)

    # --- multi-step: whole sequence inside one pallas_call ---
    outT, (hT, cT) = value_net_forward_seq(tokens_seq, h0, c0, params,
                                           n_objs=N_OBJS)
    jax.block_until_ready((outT, hT, cT))
    outT_ref, (hT_ref, cT_ref) = value_net_seq_ref(tokens_seq, h0, c0, params,
                                                   N_OBJS)
    assert outT.shape == (T, B, N_OBJS, V)
    assert jnp.allclose(outT, outT_ref, atol=3e-2, rtol=1e-2)
    assert jnp.allclose(hT, hT_ref, atol=3e-2, rtol=1e-2)
    assert jnp.allclose(cT, cT_ref, atol=3e-2, rtol=1e-2)

    # TODO(synk): sample() (multinomial sampling + nsgaii_sort pareto ranking)
    # is host-side, data-dependent control flow outside forward(); not kernelized.
    print("KERNEL_OK")
</pallas_src>

<mosaic_0001>
module attributes {stable_mosaic.version = 11 : i64} {
  func.func @valuenet_kernel(%arg0: memref<1x8x128xbf16, #tpu.memory_space<vmem>>, %arg1: memref<256x512xbf16, #tpu.memory_space<vmem>>, %arg2: memref<1x512xf32, #tpu.memory_space<vmem>>, %arg3: memref<256x512xbf16, #tpu.memory_space<vmem>>, %arg4: memref<1x512xf32, #tpu.memory_space<vmem>>, %arg5: memref<256x512xbf16, #tpu.memory_space<vmem>>, %arg6: memref<1x512xf32, #tpu.memory_space<vmem>>, %arg7: memref<3x8x128xf32, #tpu.memory_space<vmem>>, %arg8: memref<3x8x128xf32, #tpu.memory_space<vmem>>, %arg9: memref<128x128xbf16, #tpu.memory_space<vmem>>, %arg10: memref<1x128xf32, #tpu.memory_space<vmem>>, %arg11: memref<1x8x128xf32, #tpu.memory_space<vmem>>, %arg12: memref<3x8x128xf32, #tpu.memory_space<vmem>>, %arg13: memref<3x8x128xf32, #tpu.memory_space<vmem>>, %arg14: memref<3x8x128xf32, #tpu.memory_space<vmem>>, %arg15: memref<3x8x128xf32, #tpu.memory_space<vmem>>, %arg16: memref<8x256xbf16, #tpu.memory_space<vmem>>, %arg17: memref<8x256xbf16, #tpu.memory_space<vmem>>) attributes {dimension_semantics = [], scalar_prefetch = 0 : i64, scratch_operands = 4 : i64, tpu.core_type = #tpu.core_type<tc>} {
    %c0 = arith.constant 0 : index
    %c0_0 = arith.constant 0 : index
    %c0_1 = arith.constant 0 : index
    %0 = vector.load %arg7[%c0, %c0_0, %c0_1] : memref<3x8x128xf32, #tpu.memory_space<vmem>>, vector<3x8x128xf32>
    %c0_2 = arith.constant 0 : index
    %c0_3 = arith.constant 0 : index
    %c0_4 = arith.constant 0 : index
    %1 = vector.load %arg14[%c0_2, %c0_3, %c0_4] : memref<3x8x128xf32, #tpu.memory_space<vmem>>, vector<3x8x128xf32>
    tpu.vector_store %arg14[%c0_2, %c0_3, %c0_4], %0 {strides = array<i32>} : memref<3x8x128xf32, #tpu.memory_space<vmem>>, vector<3x8x128xf32>,
    %c0_5 = arith.constant 0 : index
    %c0_6 = arith.constant 0 : index
    %c0_7 = arith.constant 0 : index
    %2 = vector.load %arg8[%c0_5, %c0_6, %c0_7] : memref<3x8x128xf32, #tpu.memory_space<vmem>>, vector<3x8x128xf32>
    %c0_8 = arith.constant 0 : index
    %c0_9 = arith.constant 0 : index
    %c0_10 = arith.constant 0 : index
    %3 = vector.load %arg15[%c0_8, %c0_9, %c0_10] : memref<3x8x128xf32, #tpu.memory_space<vmem>>, vector<3x8x128xf32>
    tpu.vector_store %arg15[%c0_8, %c0_9, %c0_10], %2 {strides = array<i32>} : memref<3x8x128xf32, #tpu.memory_space<vmem>>, vector<3x8x128xf32>,
    %c0_i32 = arith.constant 0 : i32
    %4 = arith.index_cast %c0_i32 : i32 to index
    %c0_11 = arith.constant 0 : index
    %c0_12 = arith.constant 0 : index
    %5 = vector.load %arg0[%4, %c0_11, %c0_12] : memref<1x8x128xbf16, #tpu.memory_space<vmem>>, vector<1x8x128xbf16>
    %6 = vector.shape_cast %5 : vector<1x8x128xbf16> to vector<8x128xbf16>
    %c0_13 = arith.constant 0 : index
    %c0_14 = arith.constant 0 : index
    %7 = vector.load %arg16[%c0_13, %c0_14] : memref<8x256xbf16, #tpu.memory_space<vmem>>, vector<8x128xbf16>
    tpu.vector_store %arg16[%c0_13, %c0_14], %6 {strides = array<i32>} : memref<8x256xbf16, #tpu.memory_space<vmem>>, vector<8x128xbf16>,
    %c0_15 = arith.constant 0 : index
    %c0_16 = arith.constant 0 : index
    %c0_17 = arith.constant 0 : index
    %8 = vector.load %arg14[%c0_15, %c0_16, %c0_17] : memref<3x8x128xf32, #tpu.memory_space<vmem>>, vector<1x8x128xf32>
    %9 = vector.shape_cast %8 : vector<1x8x128xf32> to vector<8x128xf32>
    %10 = arith.truncf %9 : vector<8x128xf32> to vector<8x128xbf16>
    %c0_18 = arith.constant 0 : index
    %c128 = arith.constant 128 : index
    %11 = vector.load %arg16[%c0_18, %c128] : memref<8x256xbf16, #tpu.memory_space<vmem>>, vector<8x128xbf16>
    tpu.vector_store %arg16[%c0_18, %c128], %10 {strides = array<i32>} : memref<8x256xbf16, #tpu.memory_space<vmem>>, vector<8x128xbf16>,
    %c0_19 = arith.constant 0 : index
    %c0_20 = arith.constant 0 : index
    %12 = vector.load %arg16[%c0_19, %c0_20] : memref<8x256xbf16, #tpu.memory_space<vmem>>, vector<8x256xbf16>
    %c0_21 = arith.constant 0 : index
    %c0_22 = arith.constant 0 : index
    %13 = vector.load %arg1[%c0_21, %c0_22] : memref<256x512xbf16, #tpu.memory_space<vmem>>, vector<256x512xbf16>
    %cst = arith.constant dense<0.000000e+00> : vector<8x512xf32>
    %14 = tpu.matmul %12, %13, %cst {dimension_numbers = #tpu.dot_dimension_numbers<[1], [0], [0], [1], [0, 0, 1, 1], [], []>} : vector<8x256xbf16>, vector<256x512xbf16>, vector<8x512xf32> -> vector<8x512xf32>
    %c0_23 = arith.constant 0 : index
    %c0_24 = arith.constant 0 : index
    %15 = vector.load %arg2[%c0_23, %c0_24] : memref<1x512xf32, #tpu.memory_space<vmem>>, vector<1x512xf32>
    %16 = vector.broadcast %15 : vector<1x512xf32> to vector<8x512xf32>
    %17 = arith.addf %14, %16 : vector<8x512xf32>
    %18 = vector.extract_strided_slice %17 {offsets = [0, 0], sizes = [8, 128], strides = [1, 1]} : vector<8x512xf32> to vector<8x128xf32>
    %cst_25 = arith.constant 5.000000e-01 : f32
    %19 = vector.broadcast %cst_25 : f32 to vector<8x128xf32>
    %20 = arith.mulf %19, %18 : vector<8x128xf32>
    %21 = math.tanh %20 : vector<8x128xf32>
    %cst_26 = arith.constant 1.000000e+00 : f32
    %22 = vector.broadcast %cst_26 : f32 to vector<8x128xf32>
    %23 = arith.addf %21, %22 : vector<8x128xf32>
    %cst_27 = arith.constant 5.000000e-01 : f32
    %24 = vector.broadcast %cst_27 : f32 to vector<8x128xf32>
    %25 = arith.mulf %24, %23 : vector<8x128xf32>
    %26 = vector.extract_strided_slice %17 {offsets = [0, 128], sizes = [8, 128], strides = [1, 1]} : vector<8x512xf32> to vector<8x128xf32>
    %cst_28 = arith.constant 5.000000e-01 : f32
    %27 = vector.broadcast %cst_28 : f32 to vector<8x128xf32>
    %28 = arith.mulf %27, %26 : vector<8x128xf32>
    %29 = math.tanh %28 : vector<8x128xf32>
    %cst_29 = arith.constant 1.000000e+00 : f32
    %30 = vector.broadcast %cst_29 : f32 to vector<8x128xf32>
    %31 = arith.addf %29, %30 : vector<8x128xf32>
    %cst_30 = arith.constant 5.000000e-01 : f32
    %32 = vector.broadcast %cst_30 : f32 to vector<8x128xf32>
    %33 = arith.mulf %32, %31 : vector<8x128xf32>
    %34 = vector.extract_strided_slice %17 {offsets = [0, 256], sizes = [8, 128], strides = [1, 1]} : vector<8x512xf32> to vector<8x128xf32>
    %35 = math.tanh %34 : vector<8x128xf32>
    %36 = vector.extract_strided_slice %17 {offsets = [0, 384], sizes = [8, 128], strides = [1, 1]} : vector<8x512xf32> to vector<8x128xf32>
    %cst_31 = arith.constant 5.000000e-01 : f32
    %37 = vector.broadcast %cst_31 : f32 to vector<8x128xf32>
    %38 = arith.mulf %37, %36 : vector<8x128xf32>
    %39 = math.tanh %38 : vector<8x128xf32>
    %cst_32 = arith.constant 1.000000e+00 : f32
    %40 = vector.broadcast %cst_32 : f32 to vector<8x128xf32>
    %41 = arith.addf %39, %40 : vector<8x128xf32>
    %cst_33 = arith.constant 5.000000e-01 : f32
    %42 = vector.broadcast %cst_33 : f32 to vector<8x128xf32>
    %43 = arith.mulf %42, %41 : vector<8x128xf32>
    %c0_34 = arith.constant 0 : index
    %c0_35 = arith.constant 0 : index
    %c0_36 = arith.constant 0 : index
    %44 = vector.load %arg15[%c0_34, %c0_35, %c0_36] : memref<3x8x128xf32, #tpu.memory_space<vmem>>, vector<1x8x128xf32>
    %45 = vector.shape_cast %44 : vector<1x8x128xf32> to vector<8x128xf32>
    %46 = arith.mulf %33, %45 : vector<8x128xf32>
    %47 = arith.mulf %25, %35 : vector<8x128xf32>
    %48 = arith.addf %46, %47 : vector<8x128xf32>
    %49 = math.tanh %48 : vector<8x128xf32>
    %50 = arith.mulf %43, %49 : vector<8x128xf32>
    %c0_37 = arith.constant 0 : index
    %c0_38 = arith.constant 0 : index
    %c0_39 = arith.constant 0 : index
    %51 = vector.load %arg14[%c0_37, %c0_38, %c0_39] : memref<3x8x128xf32, #tpu.memory_space<vmem>>, vector<1x8x128xf32>
    %52 = vector.shape_cast %51 : vector<1x8x128xf32> to vector<8x128xf32>
    %53 = vector.shape_cast %50 : vector<8x128xf32> to vector<1x8x128xf32>
    tpu.vector_store %arg14[%c0_37, %c0_38, %c0_39], %53 {strides = array<i32>} : memref<3x8x128xf32, #tpu.memory_space<vmem>>, vector<1x8x128xf32>,
    %c0_40 = arith.constant 0 : index
    %c0_41 = arith.constant 0 : index
    %c0_42 = arith.constant 0 : index
    %54 = vector.load %arg15[%c0_40, %c0_41, %c0_42] : memref<3x8x128xf32, #tpu.memory_space<vmem>>, vector<1x8x128xf32>
    %55 = vector.shape_cast %54 : vector<1x8x128xf32> to vector<8x128xf32>
    %56 = vector.shape_cast %48 : vector<8x128xf32> to vector<1x8x128xf32>
    tpu.vector_store %arg15[%c0_40, %c0_41, %c0_42], %56 {strides = array<i32>} : memref<3x8x128xf32, #tpu.memory_space<vmem>>, vector<1x8x128xf32>,
    %57 = arith.truncf %50 : vector<8x128xf32> to vector<8x128xbf16>
    %c0_43 = arith.constant 0 : index
    %c0_44 = arith.constant 0 : index
    %58 = vector.load %arg17[%c0_43, %c0_44] : memref<8x256xbf16, #tpu.memory_space<vmem>>, vector<8x128xbf16>
    tpu.vector_store %arg17[%c0_43, %c0_44], %57 {strides = array<i32>} : memref<8x256xbf16, #tpu.memory_space<vmem>>, vector<8x128xbf16>,
    %c1 = arith.constant 1 : index
    %c0_45 = arith.constant 0 : index
    %c0_46 = arith.constant 0 : index
    %59 = vector.load %arg14[%c1, %c0_45, %c0_46] : memref<3x8x128xf32, #tpu.memory_space<vmem>>, vector<1x8x128xf32>
    %60 = vector.shape_cast %59 : vector<1x8x128xf32> to vector<8x128xf32>
    %61 = arith.truncf %60 : vector<8x128xf32> to vector<8x128xbf16>
    %c0_47 = arith.constant 0 : index
    %c128_48 = arith.constant 128 : index
    %62 = vector.load %arg17[%c0_47, %c128_48] : memref<8x256xbf16, #tpu.memory_space<vmem>>, vector<8x128xbf16>
    tpu.vector_store %arg17[%c0_47, %c128_48], %61 {strides = array<i32>} : memref<8x256xbf16, #tpu.memory_space<vmem>>, vector<8x128xbf16>,
    %c0_49 = arith.constant 0 : index
    %c0_50 = arith.constant 0 : index
    %63 = vector.load %arg17[%c0_49, %c0_50] : memref<8x256xbf16, #tpu.memory_space<vmem>>, vector<8x256xbf16>
    %c0_51 = arith.constant 0 : index
    %c0_52 = arith.constant 0 : index
    %64 = vector.load %arg3[%c0_51, %c0_52] : memref<256x512xbf16, #tpu.memory_space<vmem>>, vector<256x512xbf16>
    %cst_53 = arith.constant dense<0.000000e+00> : vector<8x512xf32>
    %65 = tpu.matmul %63, %64, %cst_53 {dimension_numbers = #tpu.dot_dimension_numbers<[1], [0], [0], [1], [0, 0, 1, 1], [], []>} : vector<8x256xbf16>, vector<256x512xbf16>, vector<8x512xf32> -> vector<8x512xf32>
    %c0_54 = arith.constant 0 : index
    %c0_55 = arith.constant 0 : index
    %66 = vector.load %arg4[%c0_54, %c0_55] : memref<1x512xf32, #tpu.memory_space<vmem>>, vector<1x512xf32>
    %67 = vector.broadcast %66 : vector<1x512xf32> to vector<8x512xf32>
    %68 = arith.addf %65, %67 : vector<8x512xf32>
    %69 = vector.extract_strided_slice %68 {offsets = [0, 0], sizes = [8, 128], strides = [1, 1]} : vector<8x512xf32> to vector<8x128xf32>
    %cst_56 = arith.constant 5.000000e-01 : f32
    %70 = vector.broadcast %cst_56 : f32 to vector<8x128xf32>
    %71 = arith.mulf %70, %69 : vector<8x128xf32>
    %72 = math.tanh %71 : vector<8x128xf32>
    %cst_57 = arith.constant 1.000000e+00 : f32
    %73 = vector.broadcast %cst_57 : f32 to vector<8x128xf32>
    %74 = arith.addf %72, %73 : vector<8x128xf32>
    %cst_58 = arith.constant 5.000000e-01 : f32
    %75 = vector.broadcast %cst_58 : f32 to vector<8x128xf32>
    %76 = arith.mulf %75, %74 : vector<8x128xf32>
    %77 = vector.extract_strided_slice %68 {offsets = [0, 128], sizes = [8, 128], strides = [1, 1]} : vector<8x512xf32> to vector<8x128xf32>
    %cst_59 = arith.constant 5.000000e-01 : f32
    %78 = vector.broadcast %cst_59 : f32 to vector<8x128xf32>
    %79 = arith.mulf %78, %77 : vector<8x128xf32>
    %80 = math.tanh %79 : vector<8x128xf32>
    %cst_60 = arith.constant 1.000000e+00 : f32
    %81 = vector.broadcast %cst_60 : f32 to vector<8x128xf32>
    %82 = arith.addf %80, %81 : vector<8x128xf32>
    %cst_61 = arith.constant 5.000000e-01 : f32
    %83 = vector.broadcast %cst_61 : f32 to vector<8x128xf32>
    %84 = arith.mulf %83, %82 : vector<8x128xf32>
    %85 = vector.extract_strided_slice %68 {offsets = [0, 256], sizes = [8, 128], strides = [1, 1]} : vector<8x512xf32> to vector<8x128xf32>
    %86 = math.tanh %85 : vector<8x128xf32>
    %87 = vector.extract_strided_slice %68 {offsets = [0, 384], sizes = [8, 128], strides = [1, 1]} : vector<8x512xf32> to vector<8x128xf32>
    %cst_62 = arith.constant 5.000000e-01 : f32
    %88 = vector.broadcast %cst_62 : f32 to vector<8x128xf32>
    %89 = arith.mulf %88, %87 : vector<8x128xf32>
    %90 = math.tanh %89 : vector<8x128xf32>
    %cst_63 = arith.constant 1.000000e+00 : f32
    %91 = vector.broadcast %cst_63 : f32 to vector<8x128xf32>
    %92 = arith.addf %90, %91 : vector<8x128xf32>
    %cst_64 = arith.constant 5.000000e-01 : f32
    %93 = vector.broadcast %cst_64 : f32 to vector<8x128xf32>
    %94 = arith.mulf %93, %92 : vector<8x128xf32>
    %c1_65 = arith.constant 1 : index
    %c0_66 = arith.constant 0 : index
    %c0_67 = arith.constant 0 : index
    %95 = vector.load %arg15[%c1_65, %c0_66, %c0_67] : memref<3x8x128xf32, #tpu.memory_space<vmem>>, vector<1x8x128xf32>
    %96 = vector.shape_cast %95 : vector<1x8x128xf32> to vector<8x128xf32>
    %97 = arith.mulf %84, %96 : vector<8x128xf32>
    %98 = arith.mulf %76, %86 : vector<8x128xf32>
    %99 = arith.addf %97, %98 : vector<8x128xf32>
    %100 = math.tanh %99 : vector<8x128xf32>
    %101 = arith.mulf %94, %100 : vector<8x128xf32>
    %c1_68 = arith.constant 1 : index
    %c0_69 = arith.constant 0 : index
    %c0_70 = arith.constant 0 : index
    %102 = vector.load %arg14[%c1_68, %c0_69, %c0_70] : memref<3x8x128xf32, #tpu.memory_space<vmem>>, vector<1x8x128xf32>
    %103 = vector.shape_cast %102 : vector<1x8x128xf32> to vector<8x128xf32>
    %104 = vector.shape_cast %101 : vector<8x128xf32> to vector<1x8x128xf32>
    tpu.vector_store %arg14[%c1_68, %c0_69, %c0_70], %104 {strides = array<i32>} : memref<3x8x128xf32, #tpu.memory_space<vmem>>, vector<1x8x128xf32>,
    %c1_71 = arith.constant 1 : index
    %c0_72 = arith.constant 0 : index
    %c0_73 = arith.constant 0 : index
    %105 = vector.load %arg15[%c1_71, %c0_72, %c0_73] : memref<3x8x128xf32, #tpu.memory_space<vmem>>, vector<1x8x128xf32>
    %106 = vector.shape_cast %105 : vector<1x8x128xf32> to vector<8x128xf32>
    %107 = vector.shape_cast %99 : vector<8x128xf32> to vector<1x8x128xf32>
    tpu.vector_store %arg15[%c1_71, %c0_72, %c0_73], %107 {strides = array<i32>} : memref<3x8x128xf32, #tpu.memory_space<vmem>>, vector<1x8x128xf32>,
    %108 = arith.truncf %101 : vector<8x128xf32> to vector<8x128xbf16>
    %c0_74 = arith.constant 0 : index
    %c0_75 = arith.constant 0 : index
    %109 = vector.load %arg17[%c0_74, %c0_75] : memref<8x256xbf16, #tpu.memory_space<vmem>>, vector<8x128xbf16>
    tpu.vector_store %arg17[%c0_74, %c0_75], %108 {strides = array<i32>} : memref<8x256xbf16, #tpu.memory_space<vmem>>, vector<8x128xbf16>,
    %c2 = arith.constant 2 : index
    %c0_76 = arith.constant 0 : index
    %c0_77 = arith.constant 0 : index
    %110 = vector.load %arg14[%c2, %c0_76, %c0_77] : memref<3x8x128xf32, #tpu.memory_space<vmem>>, vector<1x8x128xf32>
    %111 = vector.shape_cast %110 : vector<1x8x128xf32> to vector<8x128xf32>
    %112 = arith.truncf %111 : vector<8x128xf32> to vector<8x128xbf16>
    %c0_78 = arith.constant 0 : index
    %c128_79 = arith.constant 128 : index
    %113 = vector.load %arg17[%c0_78, %c128_79] : memref<8x256xbf16, #tpu.memory_space<vmem>>, vector<8x128xbf16>
    tpu.vector_store %arg17[%c0_78, %c128_79], %112 {strides = array<i32>} : memref<8x256xbf16, #tpu.memory_space<vmem>>, vector<8x128xbf16>,
    %c0_80 = arith.constant 0 : index
    %c0_81 = arith.constant 0 : index
    %114 = vector.load %arg17[%c0_80, %c0_81] : memref<8x256xbf16, #tpu.memory_space<vmem>>, vector<8x256xbf16>
    %c0_82 = arith.constant 0 : index
    %c0_83 = arith.constant 0 : index
    %115 = vector.load %arg5[%c0_82, %c0_83] : memref<256x512xbf16, #tpu.memory_space<vmem>>, vector<256x512xbf16>
    %cst_84 = arith.constant dense<0.000000e+00> : vector<8x512xf32>
    %116 = tpu.matmul %114, %115, %cst_84 {dimension_numbers = #tpu.dot_dimension_numbers<[1], [0], [0], [1], [0, 0, 1, 1], [], []>} : vector<8x256xbf16>, vector<256x512xbf16>, vector<8x512xf32> -> vector<8x512xf32>
    %c0_85 = arith.constant 0 : index
    %c0_86 = arith.constant 0 : index
    %117 = vector.load %arg6[%c0_85, %c0_86] : memref<1x512xf32, #tpu.memory_space<vmem>>, vector<1x512xf32>
    %118 = vector.broadcast %117 : vector<1x512xf32> to vector<8x512xf32>
    %119 = arith.addf %116, %118 : vector<8x512xf32>
    %120 = vector.extract_strided_slice %119 {offsets = [0, 0], sizes = [8, 128], strides = [1, 1]} : vector<8x512xf32> to vector<8x128xf32>
    %cst_87 = arith.constant 5.000000e-01 : f32
    %121 = vector.broadcast %cst_87 : f32 to vector<8x128xf32>
    %122 = arith.mulf %121, %120 : vector<8x128xf32>
    %123 = math.tanh %122 : vector<8x128xf32>
    %cst_88 = arith.constant 1.000000e+00 : f32
    %124 = vector.broadcast %cst_88 : f32 to vector<8x128xf32>
    %125 = arith.addf %123, %124 : vector<8x128xf32>
    %cst_89 = arith.constant 5.000000e-01 : f32
    %126 = vector.broadcast %cst_89 : f32 to vector<8x128xf32>
    %127 = arith.mulf %126, %125 : vector<8x128xf32>
    %128 = vector.extract_strided_slice %119 {offsets = [0, 128], sizes = [8, 128], strides = [1, 1]} : vector<8x512xf32> to vector<8x128xf32>
    %cst_90 = arith.constant 5.000000e-01 : f32
    %129 = vector.broadcast %cst_90 : f32 to vector<8x128xf32>
    %130 = arith.mulf %129, %128 : vector<8x128xf32>
    %131 = math.tanh %130 : vector<8x128xf32>
    %cst_91 = arith.constant 1.000000e+00 : f32
    %132 = vector.broadcast %cst_91 : f32 to vector<8x128xf32>
    %133 = arith.addf %131, %132 : vector<8x128xf32>
    %cst_92 = arith.constant 5.000000e-01 : f32
    %134 = vector.broadcast %cst_92 : f32 to vector<8x128xf32>
    %135 = arith.mulf %134, %133 : vector<8x128xf32>
    %136 = vector.extract_strided_slice %119 {offsets = [0, 256], sizes = [8, 128], strides = [1, 1]} : vector<8x512xf32> to vector<8x128xf32>
    %137 = math.tanh %136 : vector<8x128xf32>
    %138 = vector.extract_strided_slice %119 {offsets = [0, 384], sizes = [8, 128], strides = [1, 1]} : vector<8x512xf32> to vector<8x128xf32>
    %cst_93 = arith.constant 5.000000e-01 : f32
    %139 = vector.broadcast %cst_93 : f32 to vector<8x128xf32>
    %140 = arith.mulf %139, %138 : vector<8x128xf32>
    %141 = math.tanh %140 : vector<8x128xf32>
    %cst_94 = arith.constant 1.000000e+00 : f32
    %142 = vector.broadcast %cst_94 : f32 to vector<8x128xf32>
    %143 = arith.addf %141, %142 : vector<8x128xf32>
    %cst_95 = arith.constant 5.000000e-01 : f32
    %144 = vector.broadcast %cst_95 : f32 to vector<8x128xf32>
    %145 = arith.mulf %144, %143 : vector<8x128xf32>
    %c2_96 = arith.constant 2 : index
    %c0_97 = arith.constant 0 : index
    %c0_98 = arith.constant 0 : index
    %146 = vector.load %arg15[%c2_96, %c0_97, %c0_98] : memref<3x8x128xf32, #tpu.memory_space<vmem>>, vector<1x8x128xf32>
    %147 = vector.shape_cast %146 : vector<1x8x128xf32> to vector<8x128xf32>
    %148 = arith.mulf %135, %147 : vector<8x128xf32>
    %149 = arith.mulf %127, %137 : vector<8x128xf32>
    %150 = arith.addf %148, %149 : vector<8x128xf32>
    %151 = math.tanh %150 : vector<8x128xf32>
    %152 = arith.mulf %145, %151 : vector<8x128xf32>
    %c2_99 = arith.constant 2 : index
    %c0_100 = arith.constant 0 : index
    %c0_101 = arith.constant 0 : index
    %153 = vector.load %arg14[%c2_99, %c0_100, %c0_101] : memref<3x8x128xf32, #tpu.memory_space<vmem>>, vector<1x8x128xf32>
    %154 = vector.shape_cast %153 : vector<1x8x128xf32> to vector<8x128xf32>
    %155 = vector.shape_cast %152 : vector<8x128xf32> to vector<1x8x128xf32>
    tpu.vector_store %arg14[%c2_99, %c0_100, %c0_101], %155 {strides = array<i32>} : memref<3x8x128xf32, #tpu.memory_space<vmem>>, vector<1x8x128xf32>,
    %c2_102 = arith.constant 2 : index
    %c0_103 = arith.constant 0 : index
    %c0_104 = arith.constant 0 : index
    %156 = vector.load %arg15[%c2_102, %c0_103, %c0_104] : memref<3x8x128xf32, #tpu.memory_space<vmem>>, vector<1x8x128xf32>
    %157 = vector.shape_cast %156 : vector<1x8x128xf32> to vector<8x128xf32>
    %158 = vector.shape_cast %150 : vector<8x128xf32> to vector<1x8x128xf32>
    tpu.vector_store %arg15[%c2_102, %c0_103, %c0_104], %158 {strides = array<i32>} : memref<3x8x128xf32, #tpu.memory_space<vmem>>, vector<1x8x128xf32>,
    %159 = arith.truncf %152 : vector<8x128xf32> to vector<8x128xbf16>
    %c0_105 = arith.constant 0 : index
    %c0_106 = arith.constant 0 : index
    %160 = vector.load %arg9[%c0_105, %c0_106] : memref<128x128xbf16, #tpu.memory_space<vmem>>, vector<128x128xbf16>
    %cst_107 = arith.constant dense<0.000000e+00> : vector<8x128xf32>
    %161 = tpu.matmul %159, %160, %cst_107 {dimension_numbers = #tpu.dot_dimension_numbers<[1], [0], [0], [1], [0, 0, 1, 1], [], []>} : vector<8x128xbf16>, vector<128x128xbf16>, vector<8x128xf32> -> vector<8x128xf32>
    %c0_108 = arith.constant 0 : index
    %c0_109 = arith.constant 0 : index
    %162 = vector.load %arg10[%c0_108, %c0_109] : memref<1x128xf32, #tpu.memory_space<vmem>>, vector<1x128xf32>
    %163 = vector.broadcast %162 : vector<1x128xf32> to vector<8x128xf32>
    %164 = arith.addf %161, %163 : vector<8x128xf32>
    %165 = arith.index_cast %c0_i32 : i32 to index
    %c0_110 = arith.constant 0 : index
    %c0_111 = arith.constant 0 : index
    %166 = vector.load %arg11[%165, %c0_110, %c0_111] : memref<1x8x128xf32, #tpu.memory_space<vmem>>, vector<1x8x128xf32>
    %167 = vector.shape_cast %166 : vector<1x8x128xf32> to vector<8x128xf32>
    %168 = vector.shape_cast %164 : vector<8x128xf32> to vector<1x8x128xf32>
    tpu.vector_store %arg11[%165, %c0_110, %c0_111], %168 {strides = array<i32>} : memref<1x8x128xf32, #tpu.memory_space<vmem>>, vector<1x8x128xf32>,
    %c1_i32 = arith.constant 1 : i32
    %c0_112 = arith.constant 0 : index
    %c0_113 = arith.constant 0 : index
    %c0_114 = arith.constant 0 : index
    %169 = vector.load %arg14[%c0_112, %c0_113, %c0_114] : memref<3x8x128xf32, #tpu.memory_space<vmem>>, vector<3x8x128xf32>
    %c0_115 = arith.constant 0 : index
    %c0_116 = arith.constant 0 : index
    %c0_117 = arith.constant 0 : index
    %170 = vector.load %arg12[%c0_115, %c0_116, %c0_117] : memref<3x8x128xf32, #tpu.memory_space<vmem>>, vector<3x8x128xf32>
    tpu.vector_store %arg12[%c0_115, %c0_116, %c0_117], %169 {strides = array<i32>} : memref<3x8x128xf32, #tpu.memory_space<vmem>>, vector<3x8x128xf32>,
    %c0_118 = arith.constant 0 : index
    %c0_119 = arith.constant 0 : index
    %c0_120 = arith.constant 0 : index
    %171 = vector.load %arg15[%c0_118, %c0_119, %c0_120] : memref<3x8x128xf32, #tpu.memory_space<vmem>>, vector<3x8x128xf32>
    %c0_121 = arith.constant 0 : index
    %c0_122 = arith.constant 0 : index
    %c0_123 = arith.constant 0 : index
    %172 = vector.load %arg13[%c0_121, %c0_122, %c0_123] : memref<3x8x128xf32, #tpu.memory_space<vmem>>, vector<3x8x128xf32>
    tpu.vector_store %arg13[%c0_121, %c0_122, %c0_123], %171 {strides = array<i32>} : memref<3x8x128xf32, #tpu.memory_space<vmem>>, vector<3x8x128xf32>,
    return
  }
}

</mosaic_0001>

<llo_original>
// kernel: value_net_forward_seq.1
$region0: #{value_net_forward_seq.1}
  #allocation0 [shape = 'u32[]', space=smem, size = 0x4, offset = 0x4, fixed_abs, tag = 'smem constant byte address 0x4 - core index']
  #allocation1 [shape = 'u32[144,128]{1,0:T(1,128)}', space=vmem, size = 0x12000, scoped, tag = 'internal scratch']
  #allocation2 [shape = 'f32[3,8,128]{2,1,0:T(8,128)}', space=vmem, size = 0x3000, scoped, tag = 'scratch operand']
  #allocation3 [shape = 'f32[3,8,128]{2,1,0:T(8,128)}', space=vmem, size = 0x3000, scoped, tag = 'scratch operand']
  #allocation4 [shape = 'bf16[8,256]{1,0:T(8,128)(2,1)}', space=vmem, size = 0x1000, scoped, tag = 'scratch operand']
  #allocation5 [shape = 'bf16[8,256]{1,0:T(8,128)(2,1)}', space=vmem, size = 0x1000, scoped, tag = 'scratch operand']
  %s0 = inlined_call_operand.vmem [shape: bf16[1,8,128], index: 0, kind: input, shape index: {}]
  %s1 = inlined_call_operand.hbm [shape: bf16[256,512], index: 1, kind: input, shape index: {}]
  %s2 = inlined_call_operand.vmem [shape: f32[1,512], index: 2, kind: input, shape index: {}]
  %s3 = inlined_call_operand.hbm [shape: bf16[256,512], index: 3, kind: input, shape index: {}]
  %s4 = inlined_call_operand.hbm [shape: f32[1,512], index: 4, kind: input, shape index: {}]
  %s5 = inlined_call_operand.hbm [shape: bf16[256,512], index: 5, kind: input, shape index: {}]
  %s6 = inlined_call_operand.hbm [shape: f32[1,512], index: 6, kind: input, shape index: {}]
  %s7 = inlined_call_operand.hbm [shape: f32[3,8,128], index: 7, kind: input, shape index: {}]
  %s8 = inlined_call_operand.hbm [shape: f32[3,8,128], index: 8, kind: input, shape index: {}]
  %s9 = inlined_call_operand.vmem [shape: bf16[128,128], index: 9, kind: input, shape index: {}]
  %s10 = inlined_call_operand.vmem [shape: f32[1,128], index: 10, kind: input, shape index: {}]
  %s11 = inlined_call_operand.hbm [shape: f32[1,8,128], index: 11, kind: output, shape index: {0}]
  %s12 = inlined_call_operand.hbm [shape: f32[3,8,128], index: 12, kind: output, shape index: {1}]
  %s13 = inlined_call_operand.hbm [shape: f32[3,8,128], index: 13, kind: output, shape index: {2}]
  %14 = xla_tuple %s11, %s12, %s13
  %s15 = sld [smem:[#allocation0]]
  $region98: #{value_net_forward_seq.1} parent=0
    _
  %s17 = ssub.s32 1, %s15
  %s18 = scalar_select 0, %s17, %s15
  $region1: #{value_net_forward_seq.1} parent=0
    #allocation6 [shape = 'u8[262144]{0}', space=vmem, size = 0x40000, scoped, tag = 'input window, operand 1, single buffered']
    #allocation7 [shape = 's32[1]{0}', space=sflag, size = 0x4, scoped, tag = 'scoped memory for value_net_forward_seq.1']
    #allocation8 [shape = 's32[1]{0}', space=sflag, size = 0x4, scoped, tag = 'scoped memory for value_net_forward_seq.1']
    #allocation9 [shape = 'u8[262144]{0}', space=vmem, size = 0x40000, scoped, tag = 'input window, operand 3, single buffered']
    #allocation10 [shape = 's32[1]{0}', space=sflag, size = 0x4, scoped, tag = 'scoped memory for value_net_forward_seq.1']
    #allocation11 [shape = 'u8[2048]{0}', space=vmem, size = 0x800, scoped, tag = 'input window, operand 4, single buffered']
    #allocation12 [shape = 'u8[262144]{0}', space=vmem, size = 0x40000, scoped, tag = 'input window, operand 5, single buffered']
    #allocation13 [shape = 's32[1]{0}', space=sflag, size = 0x4, scoped, tag = 'scoped memory for value_net_forward_seq.1']
    #allocation14 [shape = 'u8[2048]{0}', space=vmem, size = 0x800, scoped, tag = 'input window, operand 6, single buffered']
    #allocation15 [shape = 'u8[12288]{0}', space=vmem, size = 0x3000, scoped, tag = 'input window, operand 7, single buffered']
    #allocation16 [shape = 's32[1]{0}', space=sflag, size = 0x4, scoped, tag = 'scoped memory for value_net_forward_seq.1']
    #allocation17 [shape = 'u8[12288]{0}', space=vmem, size = 0x3000, scoped, tag = 'input window, operand 8, single buffered']
    #allocation18 [shape = 'u8[4096]{0}', space=vmem, size = 0x1000, scoped, tag = 'output window, operand 0, single buffered']
    #allocation19 [shape = 'u8[12288]{0}', space=vmem, size = 0x3000, scoped, tag = 'output window, operand 1, single buffered']
    #allocation20 [shape = 's32[1]{0}', space=sflag, size = 0x4, scoped, tag = 'scoped memory for value_net_forward_seq.1']
    #allocation21 [shape = 'u8[12288]{0}', space=vmem, size = 0x3000, scoped, tag = 'output window, operand 2, single buffered']
    %19 = vsyncpa [#allocation7], 0
    %20 = vsyncpa [#allocation10], 0
    %21 = vsyncpa [#allocation13], 0
    %22 = vsyncpa [#allocation16], 0
    %23 = vsyncpa [#allocation8], 0
    %24 = vsyncpa [#allocation20], 0
    // Predicated region
    $region2: #{value_net_forward_seq.1} parent=1 // pred_check
      _
    $region3: #{value_net_forward_seq.1} parent=1 // pred_check_branch
      %26 = sbr.rel (0) target = $region5
    $region4: #{value_net_forward_seq.1} parent=1 // pred_region
      _
    $region5: #{value_net_forward_seq.1} parent=1 // pred_fallthru
      _
    // Predicated region
    $region6: #{value_net_forward_seq.1} parent=1 // pred_check
      _
    $region7: #{value_net_forward_seq.1} parent=1 // pred_check_branch
      %28 = sbr.rel (0) target = $region9
    $region8: #{value_net_forward_seq.1} parent=1 // pred_region
      %s30 = ssub.s32 8192, 8192
      %31 = vsyncadd [#allocation7], %s30
      %s32 = sshll.u32 [#allocation6], 4
      %s33 = int_to_ptr.vmem [resolvable:$true] %s32
      %38 = dma.hbm_to_vmem [thread:$0]  %s1, 8192, %s33, [#allocation7], 256, 256, 16
    $region9: #{value_net_forward_seq.1} parent=1 // pred_fallthru
      _
    // Predicated region
    $region10: #{value_net_forward_seq.1} parent=1 // pred_check
      _
    $region11: #{value_net_forward_seq.1} parent=1 // pred_check_branch
      %40 = sbr.rel (0) target = $region13
    $region12: #{value_net_forward_seq.1} parent=1 // pred_region
      _
    $region13: #{value_net_forward_seq.1} parent=1 // pred_fallthru
      _
    // Predicated region
    $region14: #{value_net_forward_seq.1} parent=1 // pred_check
      _
    $region15: #{value_net_forward_seq.1} parent=1 // pred_check_branch
      %42 = sbr.rel (0) target = $region17
    $region16: #{value_net_forward_seq.1} parent=1 // pred_region
      %s44 = ssub.s32 8192, 8192
      %45 = vsyncadd [#allocation10], %s44
      %s46 = sshll.u32 [#allocation9], 4
      %s47 = int_to_ptr.vmem [resolvable:$true] %s46
      %52 = dma.hbm_to_vmem [thread:$0]  %s3, 8192, %s47, [#allocation10], 256, 256, 16
    $region17: #{value_net_forward_seq.1} parent=1 // pred_fallthru
      _
    // Predicated region
    $region18: #{value_net_forward_seq.1} parent=1 // pred_check
      _
    $region19: #{value_net_forward_seq.1} parent=1 // pred_check_branch
      %54 = sbr.rel (0) target = $region21
    $region20: #{value_net_forward_seq.1} parent=1 // pred_region
      %s56 = ssub.s32 64, 64
      %57 = vsyncadd [#allocation10], %s56
      %s59 = sshll.u32 [#allocation11], 4
      %s60 = int_to_ptr.vmem [resolvable:$true] %s59
      %62 = dma.hbm_to_vmem [thread:$0]  %s4, 64, %s60, [#allocation10]
    $region21: #{value_net_forward_seq.1} parent=1 // pred_fallthru
      _
    // Predicated region
    $region22: #{value_net_forward_seq.1} parent=1 // pred_check
      _
    $region23: #{value_net_forward_seq.1} parent=1 // pred_check_branch
      %64 = sbr.rel (0) target = $region25
    $region24: #{value_net_forward_seq.1} parent=1 // pred_region
      %s66 = ssub.s32 8192, 8192
      %67 = vsyncadd [#allocation13], %s66
      %s68 = sshll.u32 [#allocation12], 4
      %s69 = int_to_ptr.vmem [resolvable:$true] %s68
      %74 = dma.hbm_to_vmem [thread:$0]  %s5, 8192, %s69, [#allocation13], 256, 256, 16
    $region25: #{value_net_forward_seq.1} parent=1 // pred_fallthru
      _
    // Predicated region
    $region26: #{value_net_forward_seq.1} parent=1 // pred_check
      _
    $region27: #{value_net_forward_seq.1} parent=1 // pred_check_branch
      %76 = sbr.rel (0) target = $region29
    $region28: #{value_net_forward_seq.1} parent=1 // pred_region
      %s78 = ssub.s32 64, 64
      %79 = vsyncadd [#allocation13], %s78
      %s81 = sshll.u32 [#allocation14], 4
      %s82 = int_to_ptr.vmem [resolvable:$true] %s81
      %84 = dma.hbm_to_vmem [thread:$0]  %s6, 64, %s82, [#allocation13]
    $region29: #{value_net_forward_seq.1} parent=1 // pred_fallthru
      _
    // Predicated region
    $region30: #{value_net_forward_seq.1} parent=1 // pred_check
      _
    $region31: #{value_net_forward_seq.1} parent=1 // pred_check_branch
      %86 = sbr.rel (0) target = $region33
    $region32: #{value_net_forward_seq.1} parent=1 // pred_region
      %s88 = ssub.s32 384, 384
      %89 = vsyncadd [#allocation16], %s88
      %s90 = sshll.u32 [#allocation15], 4
      %s91 = int_to_ptr.vmem [resolvable:$true] %s90
      %96 = dma.hbm_to_vmem [thread:$0]  %s7, 384, %s91, [#allocation16], 128, 128, 8
    $region33: #{value_net_forward_seq.1} parent=1 // pred_fallthru
      _
    // Predicated region
    $region34: #{value_net_forward_seq.1} parent=1 // pred_check
      _
    $region35: #{value_net_forward_seq.1} parent=1 // pred_check_branch
      %98 = sbr.rel (0) target = $region37
    $region36: #{value_net_forward_seq.1} parent=1 // pred_region
      %s100 = ssub.s32 384, 384
      %101 = vsyncadd [#allocation16], %s100
      %s102 = sshll.u32 [#allocation17], 4
      %s103 = int_to_ptr.vmem [resolvable:$true] %s102
      %108 = dma.hbm_to_vmem [thread:$0]  %s8, 384, %s103, [#allocation16], 128, 128, 8
    $region37: #{value_net_forward_seq.1} parent=1 // pred_fallthru
      _
    // Predicated region
    $region38: #{value_net_forward_seq.1} parent=1 // pred_check
      _
    $region39: #{value_net_forward_seq.1} parent=1 // pred_check_branch
      %110 = sbr.rel (0) target = $region41
    $region40: #{value_net_forward_seq.1} parent=1 // pred_region
      _
    $region41: #{value_net_forward_seq.1} parent=1 // pred_fallthru
      _
    // Predicated region
    $region42: #{value_net_forward_seq.1} parent=1 // pred_check
      _
    $region43: #{value_net_forward_seq.1} parent=1 // pred_check_branch
      %112 = sbr.rel (0) target = $region45
    $region44: #{value_net_forward_seq.1} parent=1 // pred_region
      _
    $region45: #{value_net_forward_seq.1} parent=1 // pred_fallthru
      _
    // Predicated region
    $region46: #{value_net_forward_seq.1} parent=1 // pred_check
      _
    $region47: #{value_net_forward_seq.1} parent=1 // pred_check_branch
      %114 = sbr.rel (0) target = $region49
    $region48: #{value_net_forward_seq.1} parent=1 // pred_region
      %115 = dma.done [#allocation7], 8192
    $region49: #{value_net_forward_seq.1} parent=1 // pred_fallthru
      _
    // Predicated region
    $region50: #{value_net_forward_seq.1} parent=1 // pred_check
      _
    $region51: #{value_net_forward_seq.1} parent=1 // pred_check_branch
      %117 = sbr.rel (0) target = $region53
    $region52: #{value_net_forward_seq.1} parent=1 // pred_region
      %118 = dma.done [#allocation10], 8192
    $region53: #{value_net_forward_seq.1} parent=1 // pred_fallthru
      _
    // Predicated region
    $region54: #{value_net_forward_seq.1} parent=1 // pred_check
      _
    $region55: #{value_net_forward_seq.1} parent=1 // pred_check_branch
      %120 = sbr.rel (0) target = $region57
    $region56: #{value_net_forward_seq.1} parent=1 // pred_region
      %121 = dma.done [#allocation10], 64
    $region57: #{value_net_forward_seq.1} parent=1 // pred_fallthru
      _
    // Predicated region
    $region58: #{value_net_forward_seq.1} parent=1 // pred_check
      _
    $region59: #{value_net_forward_seq.1} parent=1 // pred_check_branch
      %123 = sbr.rel (0) target = $region61
    $region60: #{value_net_forward_seq.1} parent=1 // pred_region
      %124 = dma.done [#allocation13], 8192
    $region61: #{value_net_forward_seq.1} parent=1 // pred_fallthru
      _
    // Predicated region
    $region62: #{value_net_forward_seq.1} parent=1 // pred_check
      _
    $region63: #{value_net_forward_seq.1} parent=1 // pred_check_branch
      %126 = sbr.rel (0) target = $region65
    $region64: #{value_net_forward_seq.1} parent=1 // pred_region
      %127 = dma.done [#allocation13], 64
    $region65: #{value_net_forward_seq.1} parent=1 // pred_fallthru
      _
    // Predicated region
    $region66: #{value_net_forward_seq.1} parent=1 // pred_check
      _
    $region67: #{value_net_forward_seq.1} parent=1 // pred_check_branch
      %129 = sbr.rel (0) target = $region69
    $region68: #{value_net_forward_seq.1} parent=1 // pred_region
      %130 = dma.done [#allocation16], 384
    $region69: #{value_net_forward_seq.1} parent=1 // pred_fallthru
      _
    // Predicated region
    $region70: #{value_net_forward_seq.1} parent=1 // pred_check
      _
    $region71: #{value_net_forward_seq.1} parent=1 // pred_check_branch
      %132 = sbr.rel (0) target = $region73
    $region72: #{value_net_forward_seq.1} parent=1 // pred_region
      %133 = dma.done [#allocation16], 384
    $region73: #{value_net_forward_seq.1} parent=1 // pred_fallthru
      _
    %v135 = vld [vmem:[#allocation15] sm:$0xff]
    %v136 = vld [vmem:[#allocation15 + $0x8] sm:$0xff]
    %v137 = vld [vmem:[#allocation15 + $0x10] sm:$0xff]
    %138 = vst [vmem:[#allocation2] sm:$0xff] %v135
    %139 = vst [vmem:[#allocation2 + $0x8] sm:$0xff] %v136
    %140 = vst [vmem:[#allocation2 + $0x10] sm:$0xff] %v137
    %v141 = vld [vmem:[#allocation17] sm:$0xff]
    %v142 = vld [vmem:[#allocation17 + $0x8] sm:$0xff]
    %v143 = vld [vmem:[#allocation17 + $0x10] sm:$0xff]
    %144 = vst [vmem:[#allocation3] sm:$0xff] %v141
    %145 = vst [vmem:[#allocation3 + $0x8] sm:$0xff] %v142
    %146 = vst [vmem:[#allocation3 + $0x10] sm:$0xff] %v143
    %v147 = vld [vmem:[%s0] sm:$0xf]
    %148 = vst [vmem:[#allocation4] sm:$0xf] %v147
    %v149 = vld [vmem:[#allocation2] sm:$0xff]
    %v150 = vpack.c.bf16 %v149, %v149
    %151 = vst [vmem:[#allocation4 + $0x4] sm:$0xf] %v150
    %v152 = vld [vmem:[#allocation4] sm:$0xff]
    %v153 = vld [vmem:[#allocation6] sm:$0xff]
    %v154 = vld [vmem:[#allocation6 + $0x8] sm:$0xff]
    %v155 = vld [vmem:[#allocation6 + $0x10] sm:$0xff]
    %v156 = vld [vmem:[#allocation6 + $0x18] sm:$0xff]
    %v157 = vld [vmem:[#allocation6 + $0x20] sm:$0xff]
    %v158 = vld [vmem:[#allocation6 + $0x28] sm:$0xff]
    %v159 = vld [vmem:[#allocation6 + $0x30] sm:$0xff]
    %v160 = vld [vmem:[#allocation6 + $0x38] sm:$0xff]
    %v161 = vld [vmem:[#allocation6 + $0x40] sm:$0xff]
    %v162 = vld [vmem:[#allocation6 + $0x48] sm:$0xff]
    %v163 = vld [vmem:[#allocation6 + $0x50] sm:$0xff]
    %v164 = vld [vmem:[#allocation6 + $0x58] sm:$0xff]
    %v165 = vld [vmem:[#allocation6 + $0x60] sm:$0xff]
    %v166 = vld [vmem:[#allocation6 + $0x68] sm:$0xff]
    %v167 = vld [vmem:[#allocation6 + $0x70] sm:$0xff]
    %v168 = vld [vmem:[#allocation6 + $0x78] sm:$0xff]
    %v169 = vld [vmem:[#allocation6 + $0x80] sm:$0xff]
    %v170 = vld [vmem:[#allocation6 + $0x88] sm:$0xff]
    %v171 = vld [vmem:[#allocation6 + $0x90] sm:$0xff]
    %v172 = vld [vmem:[#allocation6 + $0x98] sm:$0xff]
    %v173 = vld [vmem:[#allocation6 + $0xa0] sm:$0xff]
    %v174 = vld [vmem:[#allocation6 + $0xa8] sm:$0xff]
    %v175 = vld [vmem:[#allocation6 + $0xb0] sm:$0xff]
    %v176 = vld [vmem:[#allocation6 + $0xb8] sm:$0xff]
    %v177 = vld [vmem:[#allocation6 + $0xc0] sm:$0xff]
    %v178 = vld [vmem:[#allocation6 + $0xc8] sm:$0xff]
    %v179 = vld [vmem:[#allocation6 + $0xd0] sm:$0xff]
    %v180 = vld [vmem:[#allocation6 + $0xd8] sm:$0xff]
    %v181 = vld [vmem:[#allocation6 + $0xe0] sm:$0xff]
    %v182 = vld [vmem:[#allocation6 + $0xe8] sm:$0xff]
    %v183 = vld [vmem:[#allocation6 + $0xf0] sm:$0xff]
    %v184 = vld [vmem:[#allocation6 + $0xf8] sm:$0xff]
    %v185 = vld [vmem:[#allocation6 + $0x100] sm:$0xff]
    %v186 = vld [vmem:[#allocation6 + $0x108] sm:$0xff]
    %v187 = vld [vmem:[#allocation6 + $0x110] sm:$0xff]
    %v188 = vld [vmem:[#allocation6 + $0x118] sm:$0xff]
    %v189 = vld [vmem:[#allocation6 + $0x120] sm:$0xff]
    %v190 = vld [vmem:[#allocation6 + $0x128] sm:$0xff]
    %v191 = vld [vmem:[#allocation6 + $0x130] sm:$0xff]
    %v192 = vld [vmem:[#allocation6 + $0x138] sm:$0xff]
    %v193 = vld [vmem:[#allocation6 + $0x140] sm:$0xff]
    %v194 = vld [vmem:[#allocation6 + $0x148] sm:$0xff]
    %v195 = vld [vmem:[#allocation6 + $0x150] sm:$0xff]
    %v196 = vld [vmem:[#allocation6 + $0x158] sm:$0xff]
    %v197 = vld [vmem:[#allocation6 + $0x160] sm:$0xff]
    %v198 = vld [vmem:[#allocation6 + $0x168] sm:$0xff]
    %v199 = vld [vmem:[#allocation6 + $0x170] sm:$0xff]
    %v200 = vld [vmem:[#allocation6 + $0x178] sm:$0xff]
    %v201 = vld [vmem:[#allocation6 + $0x180] sm:$0xff]
    %v202 = vld [vmem:[#allocation6 + $0x188] sm:$0xff]
    %v203 = vld [vmem:[#allocation6 + $0x190] sm:$0xff]
    %v204 = vld [vmem:[#allocation6 + $0x198] sm:$0xff]
    %v205 = vld [vmem:[#allocation6 + $0x1a0] sm:$0xff]
    %v206 = vld [vmem:[#allocation6 + $0x1a8] sm:$0xff]
    %v207 = vld [vmem:[#allocation6 + $0x1b0] sm:$0xff]
    %v208 = vld [vmem:[#allocation6 + $0x1b8] sm:$0xff]
    %v209 = vld [vmem:[#allocation6 + $0x1c0] sm:$0xff]
    %v210 = vld [vmem:[#allocation6 + $0x1c8] sm:$0xff]
    %v211 = vld [vmem:[#allocation6 + $0x1d0] sm:$0xff]
    %v212 = vld [vmem:[#allocation6 + $0x1d8] sm:$0xff]
    %v213 = vld [vmem:[#allocation6 + $0x1e0] sm:$0xff]
    %v214 = vld [vmem:[#allocation6 + $0x1e8] sm:$0xff]
    %v215 = vld [vmem:[#allocation6 + $0x1f0] sm:$0xff]
    %v216 = vld [vmem:[#allocation6 + $0x1f8] sm:$0xff]
    %v217 = vld [vmem:[%s2] sm:$0xf]
    %v219 = vlaneseq
    %v220 = vshrl.u32 %v219, 7
    %v221 = vsub.s32 0, %v220
    %v222 = vrot.slane %v217, %v221
    %v223 = vlaneseq
    %v224 = vshrl.u32 %v223, 7
    %v225 = vsub.s32 1, %v224
    %v226 = vrot.slane %v217, %v225
    %v227 = vlaneseq
    %v228 = vshrl.u32 %v227, 7
    %v229 = vsub.s32 2, %v228
    %v230 = vrot.slane %v217, %v229
    %v231 = vlaneseq
    %v232 = vshrl.u32 %v231, 7
    %v233 = vsub.s32 3, %v232
    %v234 = vrot.slane %v217, %v233
    %v240 = vunpack.c.l.b16 %v152
    %v241 = vunpack.c.h.b16 %v152
    %v242 = vpack.c.b16 %v240, %v240
    %v243 = vpack.c.b16 %v241, %v241
    %v310 = vunpack.c.l.b16 %v153
    %v311 = vunpack.c.h.b16 %v153
    %v312 = vunpack.c.l.b16 %v154
    %v313 = vunpack.c.h.b16 %v154
    %v314 = vunpack.c.l.b16 %v155
    %v315 = vunpack.c.h.b16 %v155
    %v316 = vunpack.c.l.b16 %v156
    %v317 = vunpack.c.h.b16 %v156
    %v318 = vunpack.c.l.b16 %v157
    %v319 = vunpack.c.h.b16 %v157
    %v320 = vunpack.c.l.b16 %v158
    %v321 = vunpack.c.h.b16 %v158
    %v322 = vunpack.c.l.b16 %v159
    %v323 = vunpack.c.h.b16 %v159
    %v324 = vunpack.c.l.b16 %v160
    %v325 = vunpack.c.h.b16 %v160
    %v326 = vunpack.c.l.b16 %v161
    %v327 = vunpack.c.h.b16 %v161
    %v328 = vunpack.c.l.b16 %v162
    %v329 = vunpack.c.h.b16 %v162
    %v330 = vunpack.c.l.b16 %v163
    %v331 = vunpack.c.h.b16 %v163
    %v332 = vunpack.c.l.b16 %v164
    %v333 = vunpack.c.h.b16 %v164
    %v334 = vunpack.c.l.b16 %v165
    %v335 = vunpack.c.h.b16 %v165
    %v336 = vunpack.c.l.b16 %v166
    %v337 = vunpack.c.h.b16 %v166
    %v338 = vunpack.c.l.b16 %v167
    %v339 = vunpack.c.h.b16 %v167
    %v340 = vunpack.c.l.b16 %v168
    %v341 = vunpack.c.h.b16 %v168
    %v342 = vunpack.c.l.b16 %v169
    %v343 = vunpack.c.h.b16 %v169
    %v344 = vunpack.c.l.b16 %v170
    %v345 = vunpack.c.h.b16 %v170
    %v346 = vunpack.c.l.b16 %v171
    %v347 = vunpack.c.h.b16 %v171
    %v348 = vunpack.c.l.b16 %v172
    %v349 = vunpack.c.h.b16 %v172
    %v350 = vunpack.c.l.b16 %v173
    %v351 = vunpack.c.h.b16 %v173
    %v352 = vunpack.c.l.b16 %v174
    %v353 = vunpack.c.h.b16 %v174
    %v354 = vunpack.c.l.b16 %v175
    %v355 = vunpack.c.h.b16 %v175
    %v356 = vunpack.c.l.b16 %v176
    %v357 = vunpack.c.h.b16 %v176
    %v358 = vunpack.c.l.b16 %v177
    %v359 = vunpack.c.h.b16 %v177
    %v360 = vunpack.c.l.b16 %v178
    %v361 = vunpack.c.h.b16 %v178
    %v362 = vunpack.c.l.b16 %v179
    %v363 = vunpack.c.h.b16 %v179
    %v364 = vunpack.c.l.b16 %v180
    %v365 = vunpack.c.h.b16 %v180
    %v366 = vunpack.c.l.b16 %v181
    %v367 = vunpack.c.h.b16 %v181
    %v368 = vunpack.c.l.b16 %v182
    %v369 = vunpack.c.h.b16 %v182
    %v370 = vunpack.c.l.b16 %v183
    %v371 = vunpack.c.h.b16 %v183
    %v372 = vunpack.c.l.b16 %v184
    %v373 = vunpack.c.h.b16 %v184
    %v374 = vunpack.c.l.b16 %v185
    %v375 = vunpack.c.h.b16 %v185
    %v376 = vunpack.c.l.b16 %v186
    %v377 = vunpack.c.h.b16 %v186
    %v378 = vunpack.c.l.b16 %v187
    %v379 = vunpack.c.h.b16 %v187
    %v380 = vunpack.c.l.b16 %v188
    %v381 = vunpack.c.h.b16 %v188
    %v382 = vunpack.c.l.b16 %v189
    %v383 = vunpack.c.h.b16 %v189
    %v384 = vunpack.c.l.b16 %v190
    %v385 = vunpack.c.h.b16 %v190
    %v386 = vunpack.c.l.b16 %v191
    %v387 = vunpack.c.h.b16 %v191
    %v388 = vunpack.c.l.b16 %v192
    %v389 = vunpack.c.h.b16 %v192
    %v390 = vunpack.c.l.b16 %v193
    %v391 = vunpack.c.h.b16 %v193
    %v392 = vunpack.c.l.b16 %v194
    %v393 = vunpack.c.h.b16 %v194
    %v394 = vunpack.c.l.b16 %v195
    %v395 = vunpack.c.h.b16 %v195
    %v396 = vunpack.c.l.b16 %v196
    %v397 = vunpack.c.h.b16 %v196
    %v398 = vunpack.c.l.b16 %v197
    %v399 = vunpack.c.h.b16 %v197
    %v400 = vunpack.c.l.b16 %v198
    %v401 = vunpack.c.h.b16 %v198
    %v402 = vunpack.c.l.b16 %v199
    %v403 = vunpack.c.h.b16 %v199
    %v404 = vunpack.c.l.b16 %v200
    %v405 = vunpack.c.h.b16 %v200
    %v406 = vunpack.c.l.b16 %v201
    %v407 = vunpack.c.h.b16 %v201
    %v408 = vunpack.c.l.b16 %v202
    %v409 = vunpack.c.h.b16 %v202
    %v410 = vunpack.c.l.b16 %v203
    %v411 = vunpack.c.h.b16 %v203
    %v412 = vunpack.c.l.b16 %v204
    %v413 = vunpack.c.h.b16 %v204
    %v414 = vunpack.c.l.b16 %v205
    %v415 = vunpack.c.h.b16 %v205
    %v416 = vunpack.c.l.b16 %v206
    %v417 = vunpack.c.h.b16 %v206
    %v418 = vunpack.c.l.b16 %v207
    %v419 = vunpack.c.h.b16 %v207
    %v420 = vunpack.c.l.b16 %v208
    %v421 = vunpack.c.h.b16 %v208
    %v422 = vunpack.c.l.b16 %v209
    %v423 = vunpack.c.h.b16 %v209
    %v424 = vunpack.c.l.b16 %v210
    %v425 = vunpack.c.h.b16 %v210
    %v426 = vunpack.c.l.b16 %v211
    %v427 = vunpack.c.h.b16 %v211
    %v428 = vunpack.c.l.b16 %v212
    %v429 = vunpack.c.h.b16 %v212
    %v430 = vunpack.c.l.b16 %v213
    %v431 = vunpack.c.h.b16 %v213
    %v432 = vunpack.c.l.b16 %v214
    %v433 = vunpack.c.h.b16 %v214
    %v434 = vunpack.c.l.b16 %v215
    %v435 = vunpack.c.h.b16 %v215
    %v436 = vunpack.c.l.b16 %v216
    %v437 = vunpack.c.h.b16 %v216
    %v438 = vpack.c.b16 %v314, %v310
    %v439 = vpack.c.b16 %v315, %v311
    %v440 = vpack.c.b16 %v316, %v312
    %v441 = vpack.c.b16 %v317, %v313
    %v442 = vpack.c.b16 %v322, %v318
    %v443 = vpack.c.b16 %v323, %v319
    %v444 = vpack.c.b16 %v324, %v320
    %v445 = vpack.c.b16 %v325, %v321
    %v446 = vpack.c.b16 %v330, %v326
    %v447 = vpack.c.b16 %v331, %v327
    %v448 = vpack.c.b16 %v332, %v328
    %v449 = vpack.c.b16 %v333, %v329
    %v450 = vpack.c.b16 %v338, %v334
    %v451 = vpack.c.b16 %v339, %v335
    %v452 = vpack.c.b16 %v340, %v336
    %v453 = vpack.c.b16 %v341, %v337
    %v454 = vpack.c.b16 %v346, %v342
    %v455 = vpack.c.b16 %v347, %v343
    %v456 = vpack.c.b16 %v348, %v344
    %v457 = vpack.c.b16 %v349, %v345
    %v458 = vpack.c.b16 %v354, %v350
    %v459 = vpack.c.b16 %v355, %v351
    %v460 = vpack.c.b16 %v356, %v352
    %v461 = vpack.c.b16 %v357, %v353
    %v462 = vpack.c.b16 %v362, %v358
    %v463 = vpack.c.b16 %v363, %v359
    %v464 = vpack.c.b16 %v364, %v360
    %v465 = vpack.c.b16 %v365, %v361
    %v466 = vpack.c.b16 %v370, %v366
    %v467 = vpack.c.b16 %v371, %v367
    %v468 = vpack.c.b16 %v372, %v368
    %v469 = vpack.c.b16 %v373, %v369
    %v470 = vpack.c.b16 %v378, %v374
    %v471 = vpack.c.b16 %v379, %v375
    %v472 = vpack.c.b16 %v380, %v376
    %v473 = vpack.c.b16 %v381, %v377
    %v474 = vpack.c.b16 %v386, %v382
    %v475 = vpack.c.b16 %v387, %v383
    %v476 = vpack.c.b16 %v388, %v384
    %v477 = vpack.c.b16 %v389, %v385
    %v478 = vpack.c.b16 %v394, %v390
    %v479 = vpack.c.b16 %v395, %v391
    %v480 = vpack.c.b16 %v396, %v392
    %v481 = vpack.c.b16 %v397, %v393
    %v482 = vpack.c.b16 %v402, %v398
    %v483 = vpack.c.b16 %v403, %v399
    %v484 = vpack.c.b16 %v404, %v400
    %v485 = vpack.c.b16 %v405, %v401
    %v486 = vpack.c.b16 %v410, %v406
    %v487 = vpack.c.b16 %v411, %v407
    %v488 = vpack.c.b16 %v412, %v408
    %v489 = vpack.c.b16 %v413, %v409
    %v490 = vpack.c.b16 %v418, %v414
    %v491 = vpack.c.b16 %v419, %v415
    %v492 = vpack.c.b16 %v420, %v416
    %v493 = vpack.c.b16 %v421, %v417
    %v494 = vpack.c.b16 %v426, %v422
    %v495 = vpack.c.b16 %v427, %v423
    %v496 = vpack.c.b16 %v428, %v424
    %v497 = vpack.c.b16 %v429, %v425
    %v498 = vpack.c.b16 %v434, %v430
    %v499 = vpack.c.b16 %v435, %v431
    %v500 = vpack.c.b16 %v436, %v432
    %v501 = vpack.c.b16 %v437, %v433
    %566 = vmatprep.subr.bf16.mxu0 %v467
    %567 = vmatpush1.bf16.msra.mxu0 %v466
    %568 = vmatprep.subr.bf16.mxu0 %v463
    %569 = vmatpush1.bf16.msra.mxu0 %v462
    %570 = vmatprep.subr.bf16.mxu0 %v459
    %571 = vmatpush1.bf16.msra.mxu0 %v458
    %572 = vmatprep.subr.bf16.mxu0 %v455
    %573 = vmatpush1.bf16.msra.mxu0 %v454
    %574 = vmatprep.subr.bf16.mxu0 %v451
    %575 = vmatpush1.bf16.msra.mxu0 %v450
    %576 = vmatprep.subr.bf16.mxu0 %v447
    %577 = vmatpush1.bf16.msra.mxu0 %v446
    %578 = vmatprep.subr.bf16.mxu0 %v443
    %579 = vmatpush1.bf16.msra.mxu0 %v442
    %580 = vmatprep.subr.bf16.mxu0 %v439
    %581 = vmatpush1.bf16.msra.mxu0 %v438
    %582 = vmatprep.subr.bf16.mxu0 %v499
    %583 = vmatpush2.bf16.msra.mxu0 %v498
    %584 = vmatprep.subr.bf16.mxu0 %v495
    %585 = vmatpush2.bf16.msra.mxu0 %v494
    %586 = vmatprep.subr.bf16.mxu0 %v491
    %587 = vmatpush2.bf16.msra.mxu0 %v490
    %588 = vmatprep.subr.bf16.mxu0 %v487
    %589 = vmatpush2.bf16.msra.mxu0 %v486
    %590 = vmatprep.subr.bf16.mxu0 %v483
    %591 = vmatpush2.bf16.msra.mxu0 %v482
    %592 = vmatprep.subr.bf16.mxu0 %v479
    %593 = vmatpush2.bf16.msra.mxu0 %v478
    %594 = vmatprep.subr.bf16.mxu0 %v475
    %595 = vmatpush2.bf16.msra.mxu0 %v474
    %596 = vmatprep.subr.bf16.mxu0 %v471
    %597 = vmatpush2.bf16.msra.mxu0 %v470
    %598 = vmatprep.mubr.bf16.mxu0 %v243
    %599 = vmatmul.mubr.bf16.gmra.mxu0 %v242
    %v600 = vpop.f32.mrf.mxu0
    %v601 = vadd.f32 %v222, %v600
    %v602 = vpop.f32.mrf.mxu0
    %v603 = vadd.f32 %v226, %v602
    %v604 = vpop.f32.mrf.mxu0
    %v605 = vpop.f32.mrf.mxu0
    %606 = vdwg.mxu0
    %607 = vmatprep.subr.bf16.mxu0 %v469
    %608 = vmatpush1.bf16.msra.mxu0 %v468
    %609 = vmatprep.subr.bf16.mxu0 %v465
    %610 = vmatpush1.bf16.msra.mxu0 %v464
    %611 = vmatprep.subr.bf16.mxu0 %v461
    %612 = vmatpush1.bf16.msra.mxu0 %v460
    %613 = vmatprep.subr.bf16.mxu0 %v457
    %614 = vmatpush1.bf16.msra.mxu0 %v456
    %615 = vmatprep.subr.bf16.mxu0 %v453
    %616 = vmatpush1.bf16.msra.mxu0 %v452
    %617 = vmatprep.subr.bf16.mxu0 %v449
    %618 = vmatpush1.bf16.msra.mxu0 %v448
    %619 = vmatprep.subr.bf16.mxu0 %v445
    %620 = vmatpush1.bf16.msra.mxu0 %v444
    %621 = vmatprep.subr.bf16.mxu0 %v441
    %622 = vmatpush1.bf16.msra.mxu0 %v440
    %623 = vmatprep.subr.bf16.mxu0 %v501
    %624 = vmatpush2.bf16.msra.mxu0 %v500
    %625 = vmatprep.subr.bf16.mxu0 %v497
    %626 = vmatpush2.bf16.msra.mxu0 %v496
    %627 = vmatprep.subr.bf16.mxu0 %v493
    %628 = vmatpush2.bf16.msra.mxu0 %v492
    %629 = vmatprep.subr.bf16.mxu0 %v489
    %630 = vmatpush2.bf16.msra.mxu0 %v488
    %631 = vmatprep.subr.bf16.mxu0 %v485
    %632 = vmatpush2.bf16.msra.mxu0 %v484
    %633 = vmatprep.subr.bf16.mxu0 %v481
    %634 = vmatpush2.bf16.msra.mxu0 %v480
    %635 = vmatprep.subr.bf16.mxu0 %v477
    %636 = vmatpush2.bf16.msra.mxu0 %v476
    %637 = vmatprep.subr.bf16.mxu0 %v473
    %638 = vmatpush2.bf16.msra.mxu0 %v472
    %639 = vmatprep.mubr.bf16.mxu0 %v243
    %640 = vmatmul.mubr.bf16.gmra.mxu0 %v242
    %v641 = vpop.f32.mrf.mxu0
    %v642 = vadd.f32 %v230, %v641
    %v643 = vpop.f32.mrf.mxu0
    %v644 = vadd.f32 %v234, %v643
    %v645 = vpop.f32.mrf.mxu0
    %v646 = vpop.f32.mrf.mxu0
    %647 = vdwg.mxu0
    %v648 = vmul.f32 %v601, 0.5
    %v649 = vtanh.pop %v648
    %v650 = vadd.f32 %v649, 1.0
    %v651 = vmul.f32 %v650, 0.5
    %v652 = vmul.f32 %v603, 0.5
    %v653 = vtanh.pop %v652
    %v654 = vadd.f32 %v653, 1.0
    %v655 = vmul.f32 %v654, 0.5
    %v656 = vtanh.pop %v642
    %v657 = vmul.f32 %v644, 0.5
    %v658 = vtanh.pop %v657
    %v659 = vadd.f32 %v658, 1.0
    %v660 = vmul.f32 %v659, 0.5
    %v661 = vld [vmem:[#allocation3] sm:$0xff]
    %v662 = vmul.f32 %v655, %v661
    %v663 = vmul.f32 %v651, %v656
    %v664 = vadd.f32 %v662, %v663
    %v665 = vtanh.pop %v664
    %v666 = vmul.f32 %v660, %v665
    %667 = vst [vmem:[#allocation2] sm:$0xff] %v666
    %668 = vst [vmem:[#allocation3] sm:$0xff] %v664
    %v669 = vpack.c.bf16 %v666, %v666
    %670 = vst [vmem:[#allocation5] sm:$0xf] %v669
    %s671 = scalar_lea.vmem [#allocation2], 8
    %v672 = vld [vmem:[%s671] sm:$0xff]
    %v673 = vpack.c.bf16 %v672, %v672
    %674 = vst [vmem:[#allocation5 + $0x4] sm:$0xf] %v673
    %v675 = vld [vmem:[#allocation5] sm:$0xff]
    %v676 = vld [vmem:[#allocation9] sm:$0xff]
    %v677 = vld [vmem:[#allocation9 + $0x8] sm:$0xff]
    %v678 = vld [vmem:[#allocation9 + $0x10] sm:$0xff]
    %v679 = vld [vmem:[#allocation9 + $0x18] sm:$0xff]
    %v680 = vld [vmem:[#allocation9 + $0x20] sm:$0xff]
    %v681 = vld [vmem:[#allocation9 + $0x28] sm:$0xff]
    %v682 = vld [vmem:[#allocation9 + $0x30] sm:$0xff]
    %v683 = vld [vmem:[#allocation9 + $0x38] sm:$0xff]
    %v684 = vld [vmem:[#allocation9 + $0x40] sm:$0xff]
    %v685 = vld [vmem:[#allocation9 + $0x48] sm:$0xff]
    %v686 = vld [vmem:[#allocation9 + $0x50] sm:$0xff]
    %v687 = vld [vmem:[#allocation9 + $0x58] sm:$0xff]
    %v688 = vld [vmem:[#allocation9 + $0x60] sm:$0xff]
    %v689 = vld [vmem:[#allocation9 + $0x68] sm:$0xff]
    %v690 = vld [vmem:[#allocation9 + $0x70] sm:$0xff]
    %v691 = vld [vmem:[#allocation9 + $0x78] sm:$0xff]
    %v692 = vld [vmem:[#allocation9 + $0x80] sm:$0xff]
    %v693 = vld [vmem:[#allocation9 + $0x88] sm:$0xff]
    %v694 = vld [vmem:[#allocation9 + $0x90] sm:$0xff]
    %v695 = vld [vmem:[#allocation9 + $0x98] sm:$0xff]
    %v696 = vld [vmem:[#allocation9 + $0xa0] sm:$0xff]
    %v697 = vld [vmem:[#allocation9 + $0xa8] sm:$0xff]
    %v698 = vld [vmem:[#allocation9 + $0xb0] sm:$0xff]
    %v699 = vld [vmem:[#allocation9 + $0xb8] sm:$0xff]
    %v700 = vld [vmem:[#allocation9 + $0xc0] sm:$0xff]
    %v701 = vld [vmem:[#allocation9 + $0xc8] sm:$0xff]
    %v702 = vld [vmem:[#allocation9 + $0xd0] sm:$0xff]
    %v703 = vld [vmem:[#allocation9 + $0xd8] sm:$0xff]
    %v704 = vld [vmem:[#allocation9 + $0xe0] sm:$0xff]
    %v705 = vld [vmem:[#allocation9 + $0xe8] sm:$0xff]
    %v706 = vld [vmem:[#allocation9 + $0xf0] sm:$0xff]
    %v707 = vld [vmem:[#allocation9 + $0xf8] sm:$0xff]
    %v708 = vld [vmem:[#allocation9 + $0x100] sm:$0xff]
    %v709 = vld [vmem:[#allocation9 + $0x108] sm:$0xff]
    %v710 = vld [vmem:[#allocation9 + $0x110] sm:$0xff]
    %v711 = vld [vmem:[#allocation9 + $0x118] sm:$0xff]
    %v712 = vld [vmem:[#allocation9 + $0x120] sm:$0xff]
    %v713 = vld [vmem:[#allocation9 + $0x128] sm:$0xff]
    %v714 = vld [vmem:[#allocation9 + $0x130] sm:$0xff]
    %v715 = vld [vmem:[#allocation9 + $0x138] sm:$0xff]
    %v716 = vld [vmem:[#allocation9 + $0x140] sm:$0xff]
    %v717 = vld [vmem:[#allocation9 + $0x148] sm:$0xff]
    %v718 = vld [vmem:[#allocation9 + $0x150] sm:$0xff]
    %v719 = vld [vmem:[#allocation9 + $0x158] sm:$0xff]
    %v720 = vld [vmem:[#allocation9 + $0x160] sm:$0xff]
    %v721 = vld [vmem:[#allocation9 + $0x168] sm:$0xff]
    %v722 = vld [vmem:[#allocation9 + $0x170] sm:$0xff]
    %v723 = vld [vmem:[#allocation9 + $0x178] sm:$0xff]
    %v724 = vld [vmem:[#allocation9 + $0x180] sm:$0xff]
    %v725 = vld [vmem:[#allocation9 + $0x188] sm:$0xff]
    %v726 = vld [vmem:[#allocation9 + $0x190] sm:$0xff]
    %v727 = vld [vmem:[#allocation9 + $0x198] sm:$0xff]
    %v728 = vld [vmem:[#allocation9 + $0x1a0] sm:$0xff]
    %v729 = vld [vmem:[#allocation9 + $0x1a8] sm:$0xff]
    %v730 = vld [vmem:[#allocation9 + $0x1b0] sm:$0xff]
    %v731 = vld [vmem:[#allocation9 + $0x1b8] sm:$0xff]
    %v732 = vld [vmem:[#allocation9 + $0x1c0] sm:$0xff]
    %v733 = vld [vmem:[#allocation9 + $0x1c8] sm:$0xff]
    %v734 = vld [vmem:[#allocation9 + $0x1d0] sm:$0xff]
    %v735 = vld [vmem:[#allocation9 + $0x1d8] sm:$0xff]
    %v736 = vld [vmem:[#allocation9 + $0x1e0] sm:$0xff]
    %v737 = vld [vmem:[#allocation9 + $0x1e8] sm:$0xff]
    %v738 = vld [vmem:[#allocation9 + $0x1f0] sm:$0xff]
    %v739 = vld [vmem:[#allocation9 + $0x1f8] sm:$0xff]
    %v740 = vld [vmem:[#allocation11] sm:$0xf]
    %v742 = vlaneseq
    %v743 = vshrl.u32 %v742, 7
    %v744 = vsub.s32 0, %v743
    %v745 = vrot.slane %v740, %v744
    %v746 = vlaneseq
    %v747 = vshrl.u32 %v746, 7
    %v748 = vsub.s32 1, %v747
    %v749 = vrot.slane %v740, %v748
    %v750 = vlaneseq
    %v751 = vshrl.u32 %v750, 7
    %v752 = vsub.s32 2, %v751
    %v753 = vrot.slane %v740, %v752
    %v754 = vlaneseq
    %v755 = vshrl.u32 %v754, 7
    %v756 = vsub.s32 3, %v755
    %v757 = vrot.slane %v740, %v756
    %v763 = vunpack.c.l.b16 %v675
    %v764 = vunpack.c.h.b16 %v675
    %v765 = vpack.c.b16 %v763, %v763
    %v766 = vpack.c.b16 %v764, %v764
    %v833 = vunpack.c.l.b16 %v676
    %v834 = vunpack.c.h.b16 %v676
    %v835 = vunpack.c.l.b16 %v677
    %v836 = vunpack.c.h.b16 %v677
    %v837 = vunpack.c.l.b16 %v678
    %v838 = vunpack.c.h.b16 %v678
    %v839 = vunpack.c.l.b16 %v679
    %v840 = vunpack.c.h.b16 %v679
    %v841 = vunpack.c.l.b16 %v680
    %v842 = vunpack.c.h.b16 %v680
    %v843 = vunpack.c.l.b16 %v681
    %v844 = vunpack.c.h.b16 %v681
    %v845 = vunpack.c.l.b16 %v682
    %v846 = vunpack.c.h.b16 %v682
    %v847 = vunpack.c.l.b16 %v683
    %v848 = vunpack.c.h.b16 %v683
    %v849 = vunpack.c.l.b16 %v684
    %v850 = vunpack.c.h.b16 %v684
    %v851 = vunpack.c.l.b16 %v685
    %v852 = vunpack.c.h.b16 %v685
    %v853 = vunpack.c.l.b16 %v686
    %v854 = vunpack.c.h.b16 %v686
    %v855 = vunpack.c.l.b16 %v687
    %v856 = vunpack.c.h.b16 %v687
    %v857 = vunpack.c.l.b16 %v688
    %v858 = vunpack.c.h.b16 %v688
    %v859 = vunpack.c.l.b16 %v689
    %v860 = vunpack.c.h.b16 %v689
    %v861 = vunpack.c.l.b16 %v690
    %v862 = vunpack.c.h.b16 %v690
    %v863 = vunpack.c.l.b16 %v691
    %v864 = vunpack.c.h.b16 %v691
    %v865 = vunpack.c.l.b16 %v692
    %v866 = vunpack.c.h.b16 %v692
    %v867 = vunpack.c.l.b16 %v693
    %v868 = vunpack.c.h.b16 %v693
    %v869 = vunpack.c.l.b16 %v694
    %v870 = vunpack.c.h.b16 %v694
    %v871 = vunpack.c.l.b16 %v695
    %v872 = vunpack.c.h.b16 %v695
    %v873 = vunpack.c.l.b16 %v696
    %v874 = vunpack.c.h.b16 %v696
    %v875 = vunpack.c.l.b16 %v697
    %v876 = vunpack.c.h.b16 %v697
    %v877 = vunpack.c.l.b16 %v698
    %v878 = vunpack.c.h.b16 %v698
    %v879 = vunpack.c.l.b16 %v699
    %v880 = vunpack.c.h.b16 %v699
    %v881 = vunpack.c.l.b16 %v700
    %v882 = vunpack.c.h.b16 %v700
    %v883 = vunpack.c.l.b16 %v701
    %v884 = vunpack.c.h.b16 %v701
    %v885 = vunpack.c.l.b16 %v702
    %v886 = vunpack.c.h.b16 %v702
    %v887 = vunpack.c.l.b16 %v703
    %v888 = vunpack.c.h.b16 %v703
    %v889 = vunpack.c.l.b16 %v704
    %v890 = vunpack.c.h.b16 %v704
    %v891 = vunpack.c.l.b16 %v705
    %v892 = vunpack.c.h.b16 %v705
    %v893 = vunpack.c.l.b16 %v706
    %v894 = vunpack.c.h.b16 %v706
    %v895 = vunpack.c.l.b16 %v707
    %v896 = vunpack.c.h.b16 %v707
    %v897 = vunpack.c.l.b16 %v708
    %v898 = vunpack.c.h.b16 %v708
    %v899 = vunpack.c.l.b16 %v709
    %v900 = vunpack.c.h.b16 %v709
    %v901 = vunpack.c.l.b16 %v710
    %v902 = vunpack.c.h.b16 %v710
    %v903 = vunpack.c.l.b16 %v711
    %v904 = vunpack.c.h.b16 %v711
    %v905 = vunpack.c.l.b16 %v712
    %v906 = vunpack.c.h.b16 %v712
    %v907 = vunpack.c.l.b16 %v713
    %v908 = vunpack.c.h.b16 %v713
    %v909 = vunpack.c.l.b16 %v714
    %v910 = vunpack.c.h.b16 %v714
    %v911 = vunpack.c.l.b16 %v715
    %v912 = vunpack.c.h.b16 %v715
    %v913 = vunpack.c.l.b16 %v716
    %v914 = vunpack.c.h.b16 %v716
    %v915 = vunpack.c.l.b16 %v717
    %v916 = vunpack.c.h.b16 %v717
    %v917 = vunpack.c.l.b16 %v718
    %v918 = vunpack.c.h.b16 %v718
    %v919 = vunpack.c.l.b16 %v719
    %v920 = vunpack.c.h.b16 %v719
    %v921 = vunpack.c.l.b16 %v720
    %v922 = vunpack.c.h.b16 %v720
    %v923 = vunpack.c.l.b16 %v721
    %v924 = vunpack.c.h.b16 %v721
    %v925 = vunpack.c.l.b16 %v722
    %v926 = vunpack.c.h.b16 %v722
    %v927 = vunpack.c.l.b16 %v723
    %v928 = vunpack.c.h.b16 %v723
    %v929 = vunpack.c.l.b16 %v724
    %v930 = vunpack.c.h.b16 %v724
    %v931 = vunpack.c.l.b16 %v725
    %v932 = vunpack.c.h.b16 %v725
    %v933 = vunpack.c.l.b16 %v726
    %v934 = vunpack.c.h.b16 %v726
    %v935 = vunpack.c.l.b16 %v727
    %v936 = vunpack.c.h.b16 %v727
    %v937 = vunpack.c.l.b16 %v728
    %v938 = vunpack.c.h.b16 %v728
    %v939 = vunpack.c.l.b16 %v729
    %v940 = vunpack.c.h.b16 %v729
    %v941 = vunpack.c.l.b16 %v730
    %v942 = vunpack.c.h.b16 %v730
    %v943 = vunpack.c.l.b16 %v731
    %v944 = vunpack.c.h.b16 %v731
    %v945 = vunpack.c.l.b16 %v732
    %v946 = vunpack.c.h.b16 %v732
    %v947 = vunpack.c.l.b16 %v733
    %v948 = vunpack.c.h.b16 %v733
    %v949 = vunpack.c.l.b16 %v734
    %v950 = vunpack.c.h.b16 %v734
    %v951 = vunpack.c.l.b16 %v735
    %v952 = vunpack.c.h.b16 %v735
    %v953 = vunpack.c.l.b16 %v736
    %v954 = vunpack.c.h.b16 %v736
    %v955 = vunpack.c.l.b16 %v737
    %v956 = vunpack.c.h.b16 %v737
    %v957 = vunpack.c.l.b16 %v738
    %v958 = vunpack.c.h.b16 %v738
    %v959 = vunpack.c.l.b16 %v739
    %v960 = vunpack.c.h.b16 %v739
    %v961 = vpack.c.b16 %v837, %v833
    %v962 = vpack.c.b16 %v838, %v834
    %v963 = vpack.c.b16 %v839, %v835
    %v964 = vpack.c.b16 %v840, %v836
    %v965 = vpack.c.b16 %v845, %v841
    %v966 = vpack.c.b16 %v846, %v842
    %v967 = vpack.c.b16 %v847, %v843
    %v968 = vpack.c.b16 %v848, %v844
    %v969 = vpack.c.b16 %v853, %v849
    %v970 = vpack.c.b16 %v854, %v850
    %v971 = vpack.c.b16 %v855, %v851
    %v972 = vpack.c.b16 %v856, %v852
    %v973 = vpack.c.b16 %v861, %v857
    %v974 = vpack.c.b16 %v862, %v858
    %v975 = vpack.c.b16 %v863, %v859
    %v976 = vpack.c.b16 %v864, %v860
    %v977 = vpack.c.b16 %v869, %v865
    %v978 = vpack.c.b16 %v870, %v866
    %v979 = vpack.c.b16 %v871, %v867
    %v980 = vpack.c.b16 %v872, %v868
    %v981 = vpack.c.b16 %v877, %v873
    %v982 = vpack.c.b16 %v878, %v874
    %v983 = vpack.c.b16 %v879, %v875
    %v984 = vpack.c.b16 %v880, %v876
    %v985 = vpack.c.b16 %v885, %v881
    %v986 = vpack.c.b16 %v886, %v882
    %v987 = vpack.c.b16 %v887, %v883
    %v988 = vpack.c.b16 %v888, %v884
    %v989 = vpack.c.b16 %v893, %v889
    %v990 = vpack.c.b16 %v894, %v890
    %v991 = vpack.c.b16 %v895, %v891
    %v992 = vpack.c.b16 %v896, %v892
    %v993 = vpack.c.b16 %v901, %v897
    %v994 = vpack.c.b16 %v902, %v898
    %v995 = vpack.c.b16 %v903, %v899
    %v996 = vpack.c.b16 %v904, %v900
    %v997 = vpack.c.b16 %v909, %v905
    %v998 = vpack.c.b16 %v910, %v906
    %v999 = vpack.c.b16 %v911, %v907
    %v1000 = vpack.c.b16 %v912, %v908
    %v1001 = vpack.c.b16 %v917, %v913
    %v1002 = vpack.c.b16 %v918, %v914
    %v1003 = vpack.c.b16 %v919, %v915
    %v1004 = vpack.c.b16 %v920, %v916
    %v1005 = vpack.c.b16 %v925, %v921
    %v1006 = vpack.c.b16 %v926, %v922
    %v1007 = vpack.c.b16 %v927, %v923
    %v1008 = vpack.c.b16 %v928, %v924
    %v1009 = vpack.c.b16 %v933, %v929
    %v1010 = vpack.c.b16 %v934, %v930
    %v1011 = vpack.c.b16 %v935, %v931
    %v1012 = vpack.c.b16 %v936, %v932
    %v1013 = vpack.c.b16 %v941, %v937
    %v1014 = vpack.c.b16 %v942, %v938
    %v1015 = vpack.c.b16 %v943, %v939
    %v1016 = vpack.c.b16 %v944, %v940
    %v1017 = vpack.c.b16 %v949, %v945
    %v1018 = vpack.c.b16 %v950, %v946
    %v1019 = vpack.c.b16 %v951, %v947
    %v1020 = vpack.c.b16 %v952, %v948
    %v1021 = vpack.c.b16 %v957, %v953
    %v1022 = vpack.c.b16 %v958, %v954
    %v1023 = vpack.c.b16 %v959, %v955
    %v1024 = vpack.c.b16 %v960, %v956
    %1089 = vmatprep.subr.bf16.mxu0 %v990
    %1090 = vmatpush1.bf16.msra.mxu0 %v989
    %1091 = vmatprep.subr.bf16.mxu0 %v986
    %1092 = vmatpush1.bf16.msra.mxu0 %v985
    %1093 = vmatprep.subr.bf16.mxu0 %v982
    %1094 = vmatpush1.bf16.msra.mxu0 %v981
    %1095 = vmatprep.subr.bf16.mxu0 %v978
    %1096 = vmatpush1.bf16.msra.mxu0 %v977
    %1097 = vmatprep.subr.bf16.mxu0 %v974
    %1098 = vmatpush1.bf16.msra.mxu0 %v973
    %1099 = vmatprep.subr.bf16.mxu0 %v970
    %1100 = vmatpush1.bf16.msra.mxu0 %v969
    %1101 = vmatprep.subr.bf16.mxu0 %v966
    %1102 = vmatpush1.bf16.msra.mxu0 %v965
    %1103 = vmatprep.subr.bf16.mxu0 %v962
    %1104 = vmatpush1.bf16.msra.mxu0 %v961
    %1105 = vmatprep.subr.bf16.mxu0 %v1022
    %1106 = vmatpush2.bf16.msra.mxu0 %v1021
    %1107 = vmatprep.subr.bf16.mxu0 %v1018
    %1108 = vmatpush2.bf16.msra.mxu0 %v1017
    %1109 = vmatprep.subr.bf16.mxu0 %v1014
    %1110 = vmatpush2.bf16.msra.mxu0 %v1013
    %1111 = vmatprep.subr.bf16.mxu0 %v1010
    %1112 = vmatpush2.bf16.msra.mxu0 %v1009
    %1113 = vmatprep.subr.bf16.mxu0 %v1006
    %1114 = vmatpush2.bf16.msra.mxu0 %v1005
    %1115 = vmatprep.subr.bf16.mxu0 %v1002
    %1116 = vmatpush2.bf16.msra.mxu0 %v1001
    %1117 = vmatprep.subr.bf16.mxu0 %v998
    %1118 = vmatpush2.bf16.msra.mxu0 %v997
    %1119 = vmatprep.subr.bf16.mxu0 %v994
    %1120 = vmatpush2.bf16.msra.mxu0 %v993
    %1121 = vmatprep.mubr.bf16.mxu0 %v766
    %1122 = vmatmul.mubr.bf16.gmra.mxu0 %v765
    %v1123 = vpop.f32.mrf.mxu0
    %v1124 = vadd.f32 %v745, %v1123
    %v1125 = vpop.f32.mrf.mxu0
    %v1126 = vadd.f32 %v749, %v1125
    %v1127 = vpop.f32.mrf.mxu0
    %v1128 = vpop.f32.mrf.mxu0
    %1129 = vdwg.mxu0
    %1130 = vmatprep.subr.bf16.mxu0 %v992
    %1131 = vmatpush1.bf16.msra.mxu0 %v991
    %1132 = vmatprep.subr.bf16.mxu0 %v988
    %1133 = vmatpush1.bf16.msra.mxu0 %v987
    %1134 = vmatprep.subr.bf16.mxu0 %v984
    %1135 = vmatpush1.bf16.msra.mxu0 %v983
    %1136 = vmatprep.subr.bf16.mxu0 %v980
    %1137 = vmatpush1.bf16.msra.mxu0 %v979
    %1138 = vmatprep.subr.bf16.mxu0 %v976
    %1139 = vmatpush1.bf16.msra.mxu0 %v975
    %1140 = vmatprep.subr.bf16.mxu0 %v972
    %1141 = vmatpush1.bf16.msra.mxu0 %v971
    %1142 = vmatprep.subr.bf16.mxu0 %v968
    %1143 = vmatpush1.bf16.msra.mxu0 %v967
    %1144 = vmatprep.subr.bf16.mxu0 %v964
    %1145 = vmatpush1.bf16.msra.mxu0 %v963
    %1146 = vmatprep.subr.bf16.mxu0 %v1024
    %1147 = vmatpush2.bf16.msra.mxu0 %v1023
    %1148 = vmatprep.subr.bf16.mxu0 %v1020
    %1149 = vmatpush2.bf16.msra.mxu0 %v1019
    %1150 = vmatprep.subr.bf16.mxu0 %v1016
    %1151 = vmatpush2.bf16.msra.mxu0 %v1015
    %1152 = vmatprep.subr.bf16.mxu0 %v1012
    %1153 = vmatpush2.bf16.msra.mxu0 %v1011
    %1154 = vmatprep.subr.bf16.mxu0 %v1008
    %1155 = vmatpush2.bf16.msra.mxu0 %v1007
    %1156 = vmatprep.subr.bf16.mxu0 %v1004
    %1157 = vmatpush2.bf16.msra.mxu0 %v1003
    %1158 = vmatprep.subr.bf16.mxu0 %v1000
    %1159 = vmatpush2.bf16.msra.mxu0 %v999
    %1160 = vmatprep.subr.bf16.mxu0 %v996
    %1161 = vmatpush2.bf16.msra.mxu0 %v995
    %1162 = vmatprep.mubr.bf16.mxu0 %v766
    %1163 = vmatmul.mubr.bf16.gmra.mxu0 %v765
    %v1164 = vpop.f32.mrf.mxu0
    %v1165 = vadd.f32 %v753, %v1164
    %v1166 = vpop.f32.mrf.mxu0
    %v1167 = vadd.f32 %v757, %v1166
    %v1168 = vpop.f32.mrf.mxu0
    %v1169 = vpop.f32.mrf.mxu0
    %1170 = vdwg.mxu0
    %v1171 = vmul.f32 %v1124, 0.5
    %v1172 = vtanh.pop %v1171
    %v1173 = vadd.f32 %v1172, 1.0
    %v1174 = vmul.f32 %v1173, 0.5
    %v1175 = vmul.f32 %v1126, 0.5
    %v1176 = vtanh.pop %v1175
    %v1177 = vadd.f32 %v1176, 1.0
    %v1178 = vmul.f32 %v1177, 0.5
    %v1179 = vtanh.pop %v1165
    %v1180 = vmul.f32 %v1167, 0.5
    %v1181 = vtanh.pop %v1180
    %v1182 = vadd.f32 %v1181, 1.0
    %v1183 = vmul.f32 %v1182, 0.5
    %s1184 = scalar_lea.vmem [#allocation3], 8
    %v1185 = vld [vmem:[%s1184] sm:$0xff]
    %v1186 = vmul.f32 %v1178, %v1185
    %v1187 = vmul.f32 %v1174, %v1179
    %v1188 = vadd.f32 %v1186, %v1187
    %v1189 = vtanh.pop %v1188
    %v1190 = vmul.f32 %v1183, %v1189
    %1191 = vst [vmem:[%s671] sm:$0xff] %v1190
    %1192 = vst [vmem:[%s1184] sm:$0xff] %v1188
    %v1193 = vpack.c.bf16 %v1190, %v1190
    %1194 = vst [vmem:[#allocation5] sm:$0xf] %v1193
    %s1195 = scalar_lea.vmem [#allocation2], 16
    %v1196 = vld [vmem:[%s1195] sm:$0xff]
    %v1197 = vpack.c.bf16 %v1196, %v1196
    %1198 = vst [vmem:[#allocation5 + $0x4] sm:$0xf] %v1197
    %v1199 = vld [vmem:[#allocation5] sm:$0xff]
    %v1200 = vld [vmem:[#allocation12] sm:$0xff]
    %v1201 = vld [vmem:[#allocation12 + $0x8] sm:$0xff]
    %v1202 = vld [vmem:[#allocation12 + $0x10] sm:$0xff]
    %v1203 = vld [vmem:[#allocation12 + $0x18] sm:$0xff]
    %v1204 = vld [vmem:[#allocation12 + $0x20] sm:$0xff]
    %v1205 = vld [vmem:[#allocation12 + $0x28] sm:$0xff]
    %v1206 = vld [vmem:[#allocation12 + $0x30] sm:$0xff]
    %v1207 = vld [vmem:[#allocation12 + $0x38] sm:$0xff]
    %v1208 = vld [vmem:[#allocation12 + $0x40] sm:$0xff]
    %v1209 = vld [vmem:[#allocation12 + $0x48] sm:$0xff]
    %v1210 = vld [vmem:[#allocation12 + $0x50] sm:$0xff]
    %v1211 = vld [vmem:[#allocation12 + $0x58] sm:$0xff]
    %v1212 = vld [vmem:[#allocation12 + $0x60] sm:$0xff]
    %v1213 = vld [vmem:[#allocation12 + $0x68] sm:$0xff]
    %v1214 = vld [vmem:[#allocation12 + $0x70] sm:$0xff]
    %v1215 = vld [vmem:[#allocation12 + $0x78] sm:$0xff]
    %v1216 = vld [vmem:[#allocation12 + $0x80] sm:$0xff]
    %v1217 = vld [vmem:[#allocation12 + $0x88] sm:$0xff]
    %v1218 = vld [vmem:[#allocation12 + $0x90] sm:$0xff]
    %v1219 = vld [vmem:[#allocation12 + $0x98] sm:$0xff]
    %v1220 = vld [vmem:[#allocation12 + $0xa0] sm:$0xff]
    %v1221 = vld [vmem:[#allocation12 + $0xa8] sm:$0xff]
    %v1222 = vld [vmem:[#allocation12 + $0xb0] sm:$0xff]
    %v1223 = vld [vmem:[#allocation12 + $0xb8] sm:$0xff]
    %v1224 = vld [vmem:[#allocation12 + $0xc0] sm:$0xff]
    %v1225 = vld [vmem:[#allocation12 + $0xc8] sm:$0xff]
    %v1226 = vld [vmem:[#allocation12 + $0xd0] sm:$0xff]
    %v1227 = vld [vmem:[#allocation12 + $0xd8] sm:$0xff]
    %v1228 = vld [vmem:[#allocation12 + $0xe0] sm:$0xff]
    %v1229 = vld [vmem:[#allocation12 + $0xe8] sm:$0xff]
    %v1230 = vld [vmem:[#allocation12 + $0xf0] sm:$0xff]
    %v1231 = vld [vmem:[#allocation12 + $0xf8] sm:$0xff]
    %v1232 = vld [vmem:[#allocation12 + $0x100] sm:$0xff]
    %v1233 = vld [vmem:[#allocation12 + $0x108] sm:$0xff]
    %v1234 = vld [vmem:[#allocation12 + $0x110] sm:$0xff]
    %v1235 = vld [vmem:[#allocation12 + $0x118] sm:$0xff]
    %v1236 = vld [vmem:[#allocation12 + $0x120] sm:$0xff]
    %v1237 = vld [vmem:[#allocation12 + $0x128] sm:$0xff]
    %v1238 = vld [vmem:[#allocation12 + $0x130] sm:$0xff]
    %v1239 = vld [vmem:[#allocation12 + $0x138] sm:$0xff]
    %v1240 = vld [vmem:[#allocation12 + $0x140] sm:$0xff]
    %v1241 = vld [vmem:[#allocation12 + $0x148] sm:$0xff]
    %v1242 = vld [vmem:[#allocation12 + $0x150] sm:$0xff]
    %v1243 = vld [vmem:[#allocation12 + $0x158] sm:$0xff]
    %v1244 = vld [vmem:[#allocation12 + $0x160] sm:$0xff]
    %v1245 = vld [vmem:[#allocation12 + $0x168] sm:$0xff]
    %v1246 = vld [vmem:[#allocation12 + $0x170] sm:$0xff]
    %v1247 = vld [vmem:[#allocation12 + $0x178] sm:$0xff]
    %v1248 = vld [vmem:[#allocation12 + $0x180] sm:$0xff]
    %v1249 = vld [vmem:[#allocation12 + $0x188] sm:$0xff]
    %v1250 = vld [vmem:[#allocation12 + $0x190] sm:$0xff]
    %v1251 = vld [vmem:[#allocation12 + $0x198] sm:$0xff]
    %v1252 = vld [vmem:[#allocation12 + $0x1a0] sm:$0xff]
    %v1253 = vld [vmem:[#allocation12 + $0x1a8] sm:$0xff]
    %v1254 = vld [vmem:[#allocation12 + $0x1b0] sm:$0xff]
    %v1255 = vld [vmem:[#allocation12 + $0x1b8] sm:$0xff]
    %v1256 = vld [vmem:[#allocation12 + $0x1c0] sm:$0xff]
    %v1257 = vld [vmem:[#allocation12 + $0x1c8] sm:$0xff]
    %v1258 = vld [vmem:[#allocation12 + $0x1d0] sm:$0xff]
    %v1259 = vld [vmem:[#allocation12 + $0x1d8] sm:$0xff]
    %v1260 = vld [vmem:[#allocation12 + $0x1e0] sm:$0xff]
    %v1261 = vld [vmem:[#allocation12 + $0x1e8] sm:$0xff]
    %v1262 = vld [vmem:[#allocation12 + $0x1f0] sm:$0xff]
    %v1263 = vld [vmem:[#allocation12 + $0x1f8] sm:$0xff]
    %v1264 = vld [vmem:[#allocation14] sm:$0xf]
    %v1266 = vlaneseq
    %v1267 = vshrl.u32 %v1266, 7
    %v1268 = vsub.s32 0, %v1267
    %v1269 = vrot.slane %v1264, %v1268
    %v1270 = vlaneseq
    %v1271 = vshrl.u32 %v1270, 7
    %v1272 = vsub.s32 1, %v1271
    %v1273 = vrot.slane %v1264, %v1272
    %v1274 = vlaneseq
    %v1275 = vshrl.u32 %v1274, 7
    %v1276 = vsub.s32 2, %v1275
    %v1277 = vrot.slane %v1264, %v1276
    %v1278 = vlaneseq
    %v1279 = vshrl.u32 %v1278, 7
    %v1280 = vsub.s32 3, %v1279
    %v1281 = vrot.slane %v1264, %v1280
    %v1287 = vunpack.c.l.b16 %v1199
    %v1288 = vunpack.c.h.b16 %v1199
    %v1289 = vpack.c.b16 %v1287, %v1287
    %v1290 = vpack.c.b16 %v1288, %v1288
    %v1357 = vunpack.c.l.b16 %v1200
    %v1358 = vunpack.c.h.b16 %v1200
    %v1359 = vunpack.c.l.b16 %v1201
    %v1360 = vunpack.c.h.b16 %v1201
    %v1361 = vunpack.c.l.b16 %v1202
    %v1362 = vunpack.c.h.b16 %v1202
    %v1363 = vunpack.c.l.b16 %v1203
    %v1364 = vunpack.c.h.b16 %v1203
    %v1365 = vunpack.c.l.b16 %v1204
    %v1366 = vunpack.c.h.b16 %v1204
    %v1367 = vunpack.c.l.b16 %v1205
    %v1368 = vunpack.c.h.b16 %v1205
    %v1369 = vunpack.c.l.b16 %v1206
    %v1370 = vunpack.c.h.b16 %v1206
    %v1371 = vunpack.c.l.b16 %v1207
    %v1372 = vunpack.c.h.b16 %v1207
    %v1373 = vunpack.c.l.b16 %v1208
    %v1374 = vunpack.c.h.b16 %v1208
    %v1375 = vunpack.c.l.b16 %v1209
    %v1376 = vunpack.c.h.b16 %v1209
    %v1377 = vunpack.c.l.b16 %v1210
    %v1378 = vunpack.c.h.b16 %v1210
    %v1379 = vunpack.c.l.b16 %v1211
    %v1380 = vunpack.c.h.b16 %v1211
    %v1381 = vunpack.c.l.b16 %v1212
    %v1382 = vunpack.c.h.b16 %v1212
    %v1383 = vunpack.c.l.b16 %v1213
    %v1384 = vunpack.c.h.b16 %v1213
    %v1385 = vunpack.c.l.b16 %v1214
    %v1386 = vunpack.c.h.b16 %v1214
    %v1387 = vunpack.c.l.b16 %v1215
    %v1388 = vunpack.c.h.b16 %v1215
    %v1389 = vunpack.c.l.b16 %v1216
    %v1390 = vunpack.c.h.b16 %v1216
    %v1391 = vunpack.c.l.b16 %v1217
    %v1392 = vunpack.c.h.b16 %v1217
    %v1393 = vunpack.c.l.b16 %v1218
    %v1394 = vunpack.c.h.b16 %v1218
    %v1395 = vunpack.c.l.b16 %v1219
    %v1396 = vunpack.c.h.b16 %v1219
    %v1397 = vunpack.c.l.b16 %v1220
    %v1398 = vunpack.c.h.b16 %v1220
    %v1399 = vunpack.c.l.b16 %v1221
    %v1400 = vunpack.c.h.b16 %v1221
    %v1401 = vunpack.c.l.b16 %v1222
    %v1402 = vunpack.c.h.b16 %v1222
    %v1403 = vunpack.c.l.b16 %v1223
    %v1404 = vunpack.c.h.b16 %v1223
    %v1405 = vunpack.c.l.b16 %v1224
    %v1406 = vunpack.c.h.b16 %v1224
    %v1407 = vunpack.c.l.b16 %v1225
    %v1408 = vunpack.c.h.b16 %v1225
    %v1409 = vunpack.c.l.b16 %v1226
    %v1410 = vunpack.c.h.b16 %v1226
    %v1411 = vunpack.c.l.b16 %v1227
    %v1412 = vunpack.c.h.b16 %v1227
    %v1413 = vunpack.c.l.b16 %v1228
    %v1414 = vunpack.c.h.b16 %v1228
    %v1415 = vunpack.c.l.b16 %v1229
    %v1416 = vunpack.c.h.b16 %v1229
    %v1417 = vunpack.c.l.b16 %v1230
    %v1418 = vunpack.c.h.b16 %v1230
    %v1419 = vunpack.c.l.b16 %v1231
    %v1420 = vunpack.c.h.b16 %v1231
    %v1421 = vunpack.c.l.b16 %v1232
    %v1422 = vunpack.c.h.b16 %v1232
    %v1423 = vunpack.c.l.b16 %v1233
    %v1424 = vunpack.c.h.b16 %v1233
    %v1425 = vunpack.c.l.b16 %v1234
    %v1426 = vunpack.c.h.b16 %v1234
    %v1427 = vunpack.c.l.b16 %v1235
    %v1428 = vunpack.c.h.b16 %v1235
    %v1429 = vunpack.c.l.b16 %v1236
    %v1430 = vunpack.c.h.b16 %v1236
    %v1431 = vunpack.c.l.b16 %v1237
    %v1432 = vunpack.c.h.b16 %v1237
    %v1433 = vunpack.c.l.b16 %v1238
    %v1434 = vunpack.c.h.b16 %v1238
    %v1435 = vunpack.c.l.b16 %v1239
    %v1436 = vunpack.c.h.b16 %v1239
    %v1437 = vunpack.c.l.b16 %v1240
    %v1438 = vunpack.c.h.b16 %v1240
    %v1439 = vunpack.c.l.b16 %v1241
    %v1440 = vunpack.c.h.b16 %v1241
    %v1441 = vunpack.c.l.b16 %v1242
    %v1442 = vunpack.c.h.b16 %v1242
    %v1443 = vunpack.c.l.b16 %v1243
    %v1444 = vunpack.c.h.b16 %v1243
    %v1445 = vunpack.c.l.b16 %v1244
    %v1446 = vunpack.c.h.b16 %v1244
    %v1447 = vunpack.c.l.b16 %v1245
    %v1448 = vunpack.c.h.b16 %v1245
    %v1449 = vunpack.c.l.b16 %v1246
    %v1450 = vunpack.c.h.b16 %v1246
    %v1451 = vunpack.c.l.b16 %v1247
    %v1452 = vunpack.c.h.b16 %v1247
    %v1453 = vunpack.c.l.b16 %v1248
    %v1454 = vunpack.c.h.b16 %v1248
    %v1455 = vunpack.c.l.b16 %v1249
    %v1456 = vunpack.c.h.b16 %v1249
    %v1457 = vunpack.c.l.b16 %v1250
    %v1458 = vunpack.c.h.b16 %v1250
    %v1459 = vunpack.c.l.b16 %v1251
    %v1460 = vunpack.c.h.b16 %v1251
    %v1461 = vunpack.c.l.b16 %v1252
    %v1462 = vunpack.c.h.b16 %v1252
    %v1463 = vunpack.c.l.b16 %v1253
    %v1464 = vunpack.c.h.b16 %v1253
    %v1465 = vunpack.c.l.b16 %v1254
    %v1466 = vunpack.c.h.b16 %v1254
    %v1467 = vunpack.c.l.b16 %v1255
    %v1468 = vunpack.c.h.b16 %v1255
    %v1469 = vunpack.c.l.b16 %v1256
    %v1470 = vunpack.c.h.b16 %v1256
    %v1471 = vunpack.c.l.b16 %v1257
    %v1472 = vunpack.c.h.b16 %v1257
    %v1473 = vunpack.c.l.b16 %v1258
    %v1474 = vunpack.c.h.b16 %v1258
    %v1475 = vunpack.c.l.b16 %v1259
    %v1476 = vunpack.c.h.b16 %v1259
    %v1477 = vunpack.c.l.b16 %v1260
    %v1478 = vunpack.c.h.b16 %v1260
    %v1479 = vunpack.c.l.b16 %v1261
    %v1480 = vunpack.c.h.b16 %v1261
    %v1481 = vunpack.c.l.b16 %v1262
    %v1482 = vunpack.c.h.b16 %v1262
    %v1483 = vunpack.c.l.b16 %v1263
    %v1484 = vunpack.c.h.b16 %v1263
    %v1485 = vpack.c.b16 %v1361, %v1357
    %v1486 = vpack.c.b16 %v1362, %v1358
    %v1487 = vpack.c.b16 %v1363, %v1359
    %v1488 = vpack.c.b16 %v1364, %v1360
    %v1489 = vpack.c.b16 %v1369, %v1365
    %v1490 = vpack.c.b16 %v1370, %v1366
    %v1491 = vpack.c.b16 %v1371, %v1367
    %v1492 = vpack.c.b16 %v1372, %v1368
    %v1493 = vpack.c.b16 %v1377, %v1373
    %v1494 = vpack.c.b16 %v1378, %v1374
    %v1495 = vpack.c.b16 %v1379, %v1375
    %v1496 = vpack.c.b16 %v1380, %v1376
    %v1497 = vpack.c.b16 %v1385, %v1381
    %v1498 = vpack.c.b16 %v1386, %v1382
    %v1499 = vpack.c.b16 %v1387, %v1383
    %v1500 = vpack.c.b16 %v1388, %v1384
    %v1501 = vpack.c.b16 %v1393, %v1389
    %v1502 = vpack.c.b16 %v1394, %v1390
    %v1503 = vpack.c.b16 %v1395, %v1391
    %v1504 = vpack.c.b16 %v1396, %v1392
    %v1505 = vpack.c.b16 %v1401, %v1397
    %v1506 = vpack.c.b16 %v1402, %v1398
    %v1507 = vpack.c.b16 %v1403, %v1399
    %v1508 = vpack.c.b16 %v1404, %v1400
    %v1509 = vpack.c.b16 %v1409, %v1405
    %v1510 = vpack.c.b16 %v1410, %v1406
    %v1511 = vpack.c.b16 %v1411, %v1407
    %v1512 = vpack.c.b16 %v1412, %v1408
    %v1513 = vpack.c.b16 %v1417, %v1413
    %v1514 = vpack.c.b16 %v1418, %v1414
    %v1515 = vpack.c.b16 %v1419, %v1415
    %v1516 = vpack.c.b16 %v1420, %v1416
    %v1517 = vpack.c.b16 %v1425, %v1421
    %v1518 = vpack.c.b16 %v1426, %v1422
    %v1519 = vpack.c.b16 %v1427, %v1423
    %v1520 = vpack.c.b16 %v1428, %v1424
    %v1521 = vpack.c.b16 %v1433, %v1429
    %v1522 = vpack.c.b16 %v1434, %v1430
    %v1523 = vpack.c.b16 %v1435, %v1431
    %v1524 = vpack.c.b16 %v1436, %v1432
    %v1525 = vpack.c.b16 %v1441, %v1437
    %v1526 = vpack.c.b16 %v1442, %v1438
    %v1527 = vpack.c.b16 %v1443, %v1439
    %v1528 = vpack.c.b16 %v1444, %v1440
    %v1529 = vpack.c.b16 %v1449, %v1445
    %v1530 = vpack.c.b16 %v1450, %v1446
    %v1531 = vpack.c.b16 %v1451, %v1447
    %v1532 = vpack.c.b16 %v1452, %v1448
    %v1533 = vpack.c.b16 %v1457, %v1453
    %v1534 = vpack.c.b16 %v1458, %v1454
    %v1535 = vpack.c.b16 %v1459, %v1455
    %v1536 = vpack.c.b16 %v1460, %v1456
    %v1537 = vpack.c.b16 %v1465, %v1461
    %v1538 = vpack.c.b16 %v1466, %v1462
    %v1539 = vpack.c.b16 %v1467, %v1463
    %v1540 = vpack.c.b16 %v1468, %v1464
    %v1541 = vpack.c.b16 %v1473, %v1469
    %v1542 = vpack.c.b16 %v1474, %v1470
    %v1543 = vpack.c.b16 %v1475, %v1471
    %v1544 = vpack.c.b16 %v1476, %v1472
    %v1545 = vpack.c.b16 %v1481, %v1477
    %v1546 = vpack.c.b16 %v1482, %v1478
    %v1547 = vpack.c.b16 %v1483, %v1479
    %v1548 = vpack.c.b16 %v1484, %v1480
    %1613 = vmatprep.subr.bf16.mxu0 %v1514
    %1614 = vmatpush1.bf16.msra.mxu0 %v1513
    %1615 = vmatprep.subr.bf16.mxu0 %v1510
    %1616 = vmatpush1.bf16.msra.mxu0 %v1509
    %1617 = vmatprep.subr.bf16.mxu0 %v1506
    %1618 = vmatpush1.bf16.msra.mxu0 %v1505
    %1619 = vmatprep.subr.bf16.mxu0 %v1502
    %1620 = vmatpush1.bf16.msra.mxu0 %v1501
    %1621 = vmatprep.subr.bf16.mxu0 %v1498
    %1622 = vmatpush1.bf16.msra.mxu0 %v1497
    %1623 = vmatprep.subr.bf16.mxu0 %v1494
    %1624 = vmatpush1.bf16.msra.mxu0 %v1493
    %1625 = vmatprep.subr.bf16.mxu0 %v1490
    %1626 = vmatpush1.bf16.msra.mxu0 %v1489
    %1627 = vmatprep.subr.bf16.mxu0 %v1486
    %1628 = vmatpush1.bf16.msra.mxu0 %v1485
    %1629 = vmatprep.subr.bf16.mxu0 %v1546
    %1630 = vmatpush2.bf16.msra.mxu0 %v1545
    %1631 = vmatprep.subr.bf16.mxu0 %v1542
    %1632 = vmatpush2.bf16.msra.mxu0 %v1541
    %1633 = vmatprep.subr.bf16.mxu0 %v1538
    %1634 = vmatpush2.bf16.msra.mxu0 %v1537
    %1635 = vmatprep.subr.bf16.mxu0 %v1534
    %1636 = vmatpush2.bf16.msra.mxu0 %v1533
    %1637 = vmatprep.subr.bf16.mxu0 %v1530
    %1638 = vmatpush2.bf16.msra.mxu0 %v1529
    %1639 = vmatprep.subr.bf16.mxu0 %v1526
    %1640 = vmatpush2.bf16.msra.mxu0 %v1525
    %1641 = vmatprep.subr.bf16.mxu0 %v1522
    %1642 = vmatpush2.bf16.msra.mxu0 %v1521
    %1643 = vmatprep.subr.bf16.mxu0 %v1518
    %1644 = vmatpush2.bf16.msra.mxu0 %v1517
    %1645 = vmatprep.mubr.bf16.mxu0 %v1290
    %1646 = vmatmul.mubr.bf16.gmra.mxu0 %v1289
    %v1647 = vpop.f32.mrf.mxu0
    %v1648 = vadd.f32 %v1269, %v1647
    %v1649 = vpop.f32.mrf.mxu0
    %v1650 = vadd.f32 %v1273, %v1649
    %v1651 = vpop.f32.mrf.mxu0
    %v1652 = vpop.f32.mrf.mxu0
    %1653 = vdwg.mxu0
    %1654 = vmatprep.subr.bf16.mxu0 %v1516
    %1655 = vmatpush1.bf16.msra.mxu0 %v1515
    %1656 = vmatprep.subr.bf16.mxu0 %v1512
    %1657 = vmatpush1.bf16.msra.mxu0 %v1511
    %1658 = vmatprep.subr.bf16.mxu0 %v1508
    %1659 = vmatpush1.bf16.msra.mxu0 %v1507
    %1660 = vmatprep.subr.bf16.mxu0 %v1504
    %1661 = vmatpush1.bf16.msra.mxu0 %v1503
    %1662 = vmatprep.subr.bf16.mxu0 %v1500
    %1663 = vmatpush1.bf16.msra.mxu0 %v1499
    %1664 = vmatprep.subr.bf16.mxu0 %v1496
    %1665 = vmatpush1.bf16.msra.mxu0 %v1495
    %1666 = vmatprep.subr.bf16.mxu0 %v1492
    %1667 = vmatpush1.bf16.msra.mxu0 %v1491
    %1668 = vmatprep.subr.bf16.mxu0 %v1488
    %1669 = vmatpush1.bf16.msra.mxu0 %v1487
    %1670 = vmatprep.subr.bf16.mxu0 %v1548
    %1671 = vmatpush2.bf16.msra.mxu0 %v1547
    %1672 = vmatprep.subr.bf16.mxu0 %v1544
    %1673 = vmatpush2.bf16.msra.mxu0 %v1543
    %1674 = vmatprep.subr.bf16.mxu0 %v1540
    %1675 = vmatpush2.bf16.msra.mxu0 %v1539
    %1676 = vmatprep.subr.bf16.mxu0 %v1536
    %1677 = vmatpush2.bf16.msra.mxu0 %v1535
    %1678 = vmatprep.subr.bf16.mxu0 %v1532
    %1679 = vmatpush2.bf16.msra.mxu0 %v1531
    %1680 = vmatprep.subr.bf16.mxu0 %v1528
    %1681 = vmatpush2.bf16.msra.mxu0 %v1527
    %1682 = vmatprep.subr.bf16.mxu0 %v1524
    %1683 = vmatpush2.bf16.msra.mxu0 %v1523
    %1684 = vmatprep.subr.bf16.mxu0 %v1520
    %1685 = vmatpush2.bf16.msra.mxu0 %v1519
    %1686 = vmatprep.mubr.bf16.mxu0 %v1290
    %1687 = vmatmul.mubr.bf16.gmra.mxu0 %v1289
    %v1688 = vpop.f32.mrf.mxu0
    %v1689 = vadd.f32 %v1277, %v1688
    %v1690 = vpop.f32.mrf.mxu0
    %v1691 = vadd.f32 %v1281, %v1690
    %v1692 = vpop.f32.mrf.mxu0
    %v1693 = vpop.f32.mrf.mxu0
    %1694 = vdwg.mxu0
    %v1695 = vmul.f32 %v1648, 0.5
    %v1696 = vtanh.pop %v1695
    %v1697 = vadd.f32 %v1696, 1.0
    %v1698 = vmul.f32 %v1697, 0.5
    %v1699 = vmul.f32 %v1650, 0.5
    %v1700 = vtanh.pop %v1699
    %v1701 = vadd.f32 %v1700, 1.0
    %v1702 = vmul.f32 %v1701, 0.5
    %v1703 = vtanh.pop %v1689
    %v1704 = vmul.f32 %v1691, 0.5
    %v1705 = vtanh.pop %v1704
    %v1706 = vadd.f32 %v1705, 1.0
    %v1707 = vmul.f32 %v1706, 0.5
    %s1708 = scalar_lea.vmem [#allocation3], 16
    %v1709 = vld [vmem:[%s1708] sm:$0xff]
    %v1710 = vmul.f32 %v1702, %v1709
    %v1711 = vmul.f32 %v1698, %v1703
    %v1712 = vadd.f32 %v1710, %v1711
    %v1713 = vtanh.pop %v1712
    %v1714 = vmul.f32 %v1707, %v1713
    %1715 = vst [vmem:[%s1195] sm:$0xff] %v1714
    %1716 = vst [vmem:[%s1708] sm:$0xff] %v1712
    %v1717 = vpack.c.bf16 %v1714, %v1714
    %v1718 = vld [vmem:[%s9] sm:$0xf]
    %v1719 = vld [vmem:[%s9 + $0x4] sm:$0xf]
    %v1720 = vld [vmem:[%s9 + $0x8] sm:$0xf]
    %v1721 = vld [vmem:[%s9 + $0xc] sm:$0xf]
    %v1722 = vld [vmem:[%s9 + $0x10] sm:$0xf]
    %v1723 = vld [vmem:[%s9 + $0x14] sm:$0xf]
    %v1724 = vld [vmem:[%s9 + $0x18] sm:$0xf]
    %v1725 = vld [vmem:[%s9 + $0x1c] sm:$0xf]
    %v1726 = vld [vmem:[%s9 + $0x20] sm:$0xf]
    %v1727 = vld [vmem:[%s9 + $0x24] sm:$0xf]
    %v1728 = vld [vmem:[%s9 + $0x28] sm:$0xf]
    %v1729 = vld [vmem:[%s9 + $0x2c] sm:$0xf]
    %v1730 = vld [vmem:[%s9 + $0x30] sm:$0xf]
    %v1731 = vld [vmem:[%s9 + $0x34] sm:$0xf]
    %v1732 = vld [vmem:[%s9 + $0x38] sm:$0xf]
    %v1733 = vld [vmem:[%s9 + $0x3c] sm:$0xf]
    %v1734 = vld [vmem:[%s10] sm:$0x1]
    %v1736 = vlaneseq
    %v1737 = vshrl.u32 %v1736, 7
    %v1738 = vsub.s32 0, %v1737
    %v1739 = vrot.slane %v1734, %v1738
    %v1757 = vunpack.c.l.b16 %v1718
    %v1758 = vunpack.c.l.b16 %v1719
    %v1759 = vunpack.c.l.b16 %v1720
    %v1760 = vunpack.c.l.b16 %v1721
    %v1761 = vunpack.c.l.b16 %v1722
    %v1762 = vunpack.c.l.b16 %v1723
    %v1763 = vunpack.c.l.b16 %v1724
    %v1764 = vunpack.c.l.b16 %v1725
    %v1765 = vunpack.c.l.b16 %v1726
    %v1766 = vunpack.c.l.b16 %v1727
    %v1767 = vunpack.c.l.b16 %v1728
    %v1768 = vunpack.c.l.b16 %v1729
    %v1769 = vunpack.c.l.b16 %v1730
    %v1770 = vunpack.c.l.b16 %v1731
    %v1771 = vunpack.c.l.b16 %v1732
    %v1772 = vunpack.c.l.b16 %v1733
    %v1773 = vpack.c.b16 %v1758, %v1757
    %v1774 = vpack.c.b16 %v1760, %v1759
    %v1775 = vpack.c.b16 %v1762, %v1761
    %v1776 = vpack.c.b16 %v1764, %v1763
    %v1777 = vpack.c.b16 %v1766, %v1765
    %v1778 = vpack.c.b16 %v1768, %v1767
    %v1779 = vpack.c.b16 %v1770, %v1769
    %v1780 = vpack.c.b16 %v1772, %v1771
    %1789 = vmatprep.subr.bf16.mxu0 0
    %1790 = vmatpush1.bf16.msra.mxu0 %v1780
    %1791 = vmatprep.subr.bf16.mxu0 0
    %1792 = vmatpush1.bf16.msra.mxu0 %v1779
    %1793 = vmatprep.subr.bf16.mxu0 0
    %1794 = vmatpush1.bf16.msra.mxu0 %v1778
    %1795 = vmatprep.subr.bf16.mxu0 0
    %1796 = vmatpush1.bf16.msra.mxu0 %v1777
    %1797 = vmatprep.subr.bf16.mxu0 0
    %1798 = vmatpush1.bf16.msra.mxu0 %v1776
    %1799 = vmatprep.subr.bf16.mxu0 0
    %1800 = vmatpush1.bf16.msra.mxu0 %v1775
    %1801 = vmatprep.subr.bf16.mxu0 0
    %1802 = vmatpush1.bf16.msra.mxu0 %v1774
    %1803 = vmatprep.subr.bf16.mxu0 0
    %1804 = vmatpush1.bf16.msra.mxu0 %v1773
    %1805 = vmatprep.subr.bf16.mxu0 0
    %1806 = vmatpush2.bf16.msra.mxu0 0
    %1807 = vmatprep.subr.bf16.mxu0 0
    %1808 = vmatpush2.bf16.msra.mxu0 0
    %1809 = vmatprep.subr.bf16.mxu0 0
    %1810 = vmatpush2.bf16.msra.mxu0 0
    %1811 = vmatprep.subr.bf16.mxu0 0
    %1812 = vmatpush2.bf16.msra.mxu0 0
    %1813 = vmatprep.subr.bf16.mxu0 0
    %1814 = vmatpush2.bf16.msra.mxu0 0
    %1815 = vmatprep.subr.bf16.mxu0 0
    %1816 = vmatpush2.bf16.msra.mxu0 0
    %1817 = vmatprep.subr.bf16.mxu0 0
    %1818 = vmatpush2.bf16.msra.mxu0 0
    %1819 = vmatprep.subr.bf16.mxu0 0
    %1820 = vmatpush2.bf16.msra.mxu0 0
    %1821 = vmatprep.mubr.bf16.mxu0 0
    %1822 = vmatmul.mubr.bf16.gmra.mxu0 %v1717
    %v1823 = vpop.f32.mrf.mxu0
    %v1824 = vadd.f32 %v1739, %v1823
    %v1825 = vpop.f32.mrf.mxu0
    %v1826 = vpop.f32.mrf.mxu0
    %v1827 = vpop.f32.mrf.mxu0
    %1828 = vdwg.mxu0
    %1829 = vst [vmem:[#allocation18] sm:$0xff] %v1824
    %v1830 = vld [vmem:[#allocation2] sm:$0xff]
    %v1831 = vld [vmem:[#allocation2 + $0x8] sm:$0xff]
    %v1832 = vld [vmem:[#allocation2 + $0x10] sm:$0xff]
    %1833 = vst [vmem:[#allocation19] sm:$0xff] %v1830
    %1834 = vst [vmem:[#allocation19 + $0x8] sm:$0xff] %v1831
    %1835 = vst [vmem:[#allocation19 + $0x10] sm:$0xff] %v1832
    %v1836 = vld [vmem:[#allocation3] sm:$0xff]
    %v1837 = vld [vmem:[#allocation3 + $0x8] sm:$0xff]
    %v1838 = vld [vmem:[#allocation3 + $0x10] sm:$0xff]
    %1839 = vst [vmem:[#allocation21] sm:$0xff] %v1836
    %1840 = vst [vmem:[#allocation21 + $0x8] sm:$0xff] %v1837
    %1841 = vst [vmem:[#allocation21 + $0x10] sm:$0xff] %v1838
    // Predicated region
    $region74: #{value_net_forward_seq.1} parent=1 // pred_check
      _
    $region75: #{value_net_forward_seq.1} parent=1 // pred_check_branch
      %1843 = sbr.rel (0) target = $region77
    $region76: #{value_net_forward_seq.1} parent=1 // pred_region
      %s1845 = ssub.s32 128, 128
      %1846 = vsyncadd [#allocation8], %s1845
      %s1848 = sshll.u32 [#allocation18], 4
      %s1849 = int_to_ptr.vmem [resolvable:$true] %s1848
      %1851 = dma.vmem_to_hbm [thread:$0]  %s1849, 128, %s11, [#allocation8]
    $region77: #{value_net_forward_seq.1} parent=1 // pred_fallthru
      _
    // Predicated region
    $region78: #{value_net_forward_seq.1} parent=1 // pred_check
      _
    $region79: #{value_net_forward_seq.1} parent=1 // pred_check_branch
      %1853 = sbr.rel (0) target = $region81
    $region80: #{value_net_forward_seq.1} parent=1 // pred_region
      %s1855 = ssub.s32 384, 384
      %1856 = vsyncadd [#allocation20], %s1855
      %s1857 = sshll.u32 [#allocation19], 4
      %s1858 = int_to_ptr.vmem [resolvable:$true] %s1857
      %1863 = dma.vmem_to_hbm [thread:$0]  %s1858, 384, %s12, [#allocation20], 128, 128, 8
    $region81: #{value_net_forward_seq.1} parent=1 // pred_fallthru
      _
    // Predicated region
    $region82: #{value_net_forward_seq.1} parent=1 // pred_check
      _
    $region83: #{value_net_forward_seq.1} parent=1 // pred_check_branch
      %1865 = sbr.rel (0) target = $region85
    $region84: #{value_net_forward_seq.1} parent=1 // pred_region
      %s1867 = ssub.s32 384, 384
      %1868 = vsyncadd [#allocation20], %s1867
      %s1869 = sshll.u32 [#allocation21], 4
      %s1870 = int_to_ptr.vmem [resolvable:$true] %s1869
      %1875 = dma.vmem_to_hbm [thread:$0]  %s1870, 384, %s13, [#allocation20], 128, 128, 8
    $region85: #{value_net_forward_seq.1} parent=1 // pred_fallthru
      _
    // Predicated region
    $region86: #{value_net_forward_seq.1} parent=1 // pred_check
      _
    $region87: #{value_net_forward_seq.1} parent=1 // pred_check_branch
      %1877 = sbr.rel (0) target = $region89
    $region88: #{value_net_forward_seq.1} parent=1 // pred_region
      %1878 = dma.done [#allocation8], 128
    $region89: #{value_net_forward_seq.1} parent=1 // pred_fallthru
      _
    // Predicated region
    $region90: #{value_net_forward_seq.1} parent=1 // pred_check
      _
    $region91: #{value_net_forward_seq.1} parent=1 // pred_check_branch
      %1880 = sbr.rel (0) target = $region93
    $region92: #{value_net_forward_seq.1} parent=1 // pred_region
      %1881 = dma.done [#allocation20], 384
    $region93: #{value_net_forward_seq.1} parent=1 // pred_fallthru
      _
    // Predicated region
    $region94: #{value_net_forward_seq.1} parent=1 // pred_check
      _
    $region95: #{value_net_forward_seq.1} parent=1 // pred_check_branch
      %1883 = sbr.rel (0) target = $region97
    $region96: #{value_net_forward_seq.1} parent=1 // pred_region
      %1884 = dma.done [#allocation20], 384
    $region97: #{value_net_forward_seq.1} parent=1 // pred_fallthru
      _
    %1885 = vsyncpa [#allocation7], 1
    %1886 = vsyncpa [#allocation10], 1
    %1887 = vsyncpa [#allocation13], 1
    %1888 = vsyncpa [#allocation16], 1
    %1889 = vsyncpa [#allocation8], 1
    %1890 = vsyncpa [#allocation20], 1

</llo_original>
